<compile_context>
chip_gen: v7x
topology: tpu7x:2x2x1
jax: 0.10.0
libtpu: 0.0.40
codegen_flags: <defaults>
</compile_context>

<pallas_src>
import jax
import jax.numpy as jnp
from jax.experimental import pallas as pl
from jax.experimental.pallas import tpu as pltpu


def _nonlocal_flash_kernel(th_ref, ph_ref, g_ref, xres_ref, ww_ref, wb_ref,
                           out_ref, m_sc, l_sc, acc_sc):
    # th_ref  : (1, TQ, Ci) bf16  precomputed theta(x) query tile
    # ph_ref  : (1, TK, Ci) bf16  precomputed phi(x)   key tile
    # g_ref   : (1, TK, Ci) bf16  precomputed g(x)     value tile
    # xres_ref: (1, C, TQ)  f32   residual tile (native NCHW channels-first layout)
    # ww_ref  : (C, Ci)     bf16  BN-folded W weight
    # wb_ref  : (C, 1)      f32   BN-folded W bias
    # out_ref : (1, C, TQ)        channels-first output tile (lane-dense store)
    kv = pl.program_id(2)

    @pl.when(kv == 0)
    def _init():
        m_sc[...] = jnp.full_like(m_sc, -jnp.inf)
        l_sc[...] = jnp.zeros_like(l_sc)
        acc_sc[...] = jnp.zeros_like(acc_sc)

    # s = theta @ phi^T via NT contraction over Ci (bf16 operands, f32 MXU accumulate).
    s = jax.lax.dot_general(th_ref[0], ph_ref[0],
                            dimension_numbers=(((1,), (1,)), ((), ())),
                            preferred_element_type=jnp.float32)          # (TQ, TK)

    # Online softmax update.
    m_prev = m_sc[...]
    m_new = jnp.maximum(m_prev, jnp.max(s, axis=-1, keepdims=True))
    alpha = jnp.exp(m_prev - m_new)
    p = jnp.exp(s - m_new)                                               # (TQ, TK) f32
    l_sc[...] = alpha * l_sc[...] + jnp.sum(p, axis=-1, keepdims=True)
    acc_sc[...] = alpha * acc_sc[...] + jnp.dot(
        p.astype(jnp.bfloat16), g_ref[0], preferred_element_type=jnp.float32)
    m_sc[...] = m_new

    @pl.when(kv == pl.num_programs(2) - 1)
    def _finalize():
        # Normalize with the EUP approximate reciprocal (division off the VALU).
        y = (acc_sc[...] * pl.reciprocal(l_sc[...], approx=True)
             ).astype(jnp.bfloat16)                                      # (TQ, Ci)
        # wy[c, q] = sum_i W_cf[c, i] * y[q, i] -> channels-first, lane-dense (C, TQ).
        wy = jax.lax.dot_general(ww_ref[...], y,
                                 dimension_numbers=(((1,), (1,)), ((), ())),
                                 preferred_element_type=jnp.float32)     # (C, TQ)
        out_ref[0] = (wy + wb_ref[...] + xres_ref[0]).astype(out_ref.dtype)


def _pick_block(hw, target, align):
    """Largest divisor of hw that is <= target and a multiple of `align`; else hw."""
    # TODO(synk): for HW with no 128-aligned divisor this falls back to TK/TQ = HW;
    # pad HW to a multiple of 128 in the wrapper if that footprint is too large.
    t = (min(target, hw) // align) * align
    while t >= align:
        if hw % t == 0:
            return t
        t -= align
    return hw


def _vmem_limit_bytes():
    """Per-generation scoped-VMEM budget: ~3/4 of physical, capped at 100 MiB."""
    try:
        cap = pltpu.get_tpu_info().vmem_capacity_bytes
    except Exception:
        cap = 64 * 1024 * 1024  # conservative (v7x) fallback
    return int(min(100 * 1024 * 1024, cap * 3 // 4))


def nonlocal_attention(x_nchw, params, *, tq=1024, tk=512):
    """x_nchw: (B, C, H, W) float32. Returns (B, C, H, W)."""
    B, C, H, W = x_nchw.shape
    HW = H * W
    Ci = params["theta_w"].shape[1]

    # Channels-first view is a free reshape of NCHW (residual + output layout);
    # the channels-last view is only used for the one-time host-side projections.
    x_cf = x_nchw.reshape(B, C, HW)                       # (B, C, HW) f32
    x_cl = jnp.transpose(x_cf, (0, 2, 1))                 # (B, HW, C) f32

    # Hoisted 1x1-conv projections (single XLA matmuls) -> bf16 streams for the kernel.
    theta = (x_cl @ params["theta_w"] + params["theta_b"]).astype(jnp.bfloat16)
    phi = (x_cl @ params["phi_w"] + params["phi_b"]).astype(jnp.bfloat16)
    g = (x_cl @ params["g_w"] + params["g_b"]).astype(jnp.bfloat16)

    # Fold inference-mode BatchNorm into the W projection (exact: gamma=beta=0 at init),
    # and cast the weight to bf16 once (hoisted out of the kernel).
    scale = params["bn_gamma"] * jax.lax.rsqrt(params["bn_var"] + 1e-5)   # (1, C)
    w_cf = (params["W_w"] * scale).T.astype(jnp.bfloat16)                 # (C, Ci) bf16
    b_cf = (params["W_b"] * scale + params["bn_beta"]
            - params["bn_mean"] * scale).reshape(C, 1)                    # (C, 1) f32

    # Tile sizes: both the query tile (output lane axis) and the key tile (score lane
    # axis / p@g contraction) are 128-aligned.
    TQ = _pick_block(HW, tq, 128)
    TK = _pick_block(HW, tk, 128)
    # v7x megacore guard: keep >= 2 parallel (b, q-tile) work items per chip.
    while B * (HW // TQ) < 2 and TQ % 2 == 0 and TQ >= 256 and HW % (TQ // 2) == 0:
        TQ //= 2

    grid = (B, HW // TQ, HW // TK)
    const = lambda shp: pl.BlockSpec(shp, lambda b, qi, ki: (0, 0))

    grid_spec = pltpu.PrefetchScalarGridSpec(
        num_scalar_prefetch=0,
        grid=grid,
        in_specs=[
            pl.BlockSpec((1, TQ, Ci), lambda b, qi, ki: (b, qi, 0)),   # theta (q tile)
            pl.BlockSpec((1, TK, Ci), lambda b, qi, ki: (b, ki, 0)),   # phi   (k tile)
            pl.BlockSpec((1, TK, Ci), lambda b, qi, ki: (b, ki, 0)),   # g     (k tile)
            pl.BlockSpec((1, C, TQ), lambda b, qi, ki: (b, 0, qi)),    # residual (cf)
            const((C, Ci)),                                            # W weight (bf16)
            const((C, 1)),                                             # W bias (f32)
        ],
        out_specs=pl.BlockSpec((1, C, TQ), lambda b, qi, ki: (b, 0, qi)),
        scratch_shapes=[
            pltpu.VMEM((TQ, 1), jnp.float32),     # m (running max)
            pltpu.VMEM((TQ, 1), jnp.float32),     # l (running denom)
            pltpu.VMEM((TQ, Ci), jnp.float32),    # acc (running numerator)
        ],
    )

    out_cf = pl.pallas_call(
        _nonlocal_flash_kernel,
        out_shape=jax.ShapeDtypeStruct((B, C, HW), x_nchw.dtype),
        grid_spec=grid_spec,
        compiler_params=pltpu.CompilerParams(
            dimension_semantics=("parallel", "parallel", "arbitrary"),
            vmem_limit_bytes=_vmem_limit_bytes(),
        ),
    )(theta, phi, g, x_cf, w_cf, b_cf)
    return out_cf.reshape(B, C, H, W)


def nonlocal_attention_ref(x_nchw, params):
    """Pure-JAX f32 reference mirroring the PyTorch forward (eval-mode BN)."""
    B, C, H, W = x_nchw.shape
    HW = H * W
    x = jnp.transpose(x_nchw.reshape(B, C, HW), (0, 2, 1))  # (B, HW, C)
    theta = x @ params["theta_w"] + params["theta_b"]
    phi = x @ params["phi_w"] + params["phi_b"]
    g = x @ params["g_w"] + params["g_b"]
    f = jnp.einsum("bqc,bkc->bqk", theta, phi)
    f_div_c = jax.nn.softmax(f, axis=-1)
    y = jnp.einsum("bqk,bkc->bqc", f_div_c, g)
    wy = y @ params["W_w"] + params["W_b"]
    bn = ((wy - params["bn_mean"]) * jax.lax.rsqrt(params["bn_var"] + 1e-5)
          * params["bn_gamma"] + params["bn_beta"])
    z = bn + x
    return jnp.transpose(z, (0, 2, 1)).reshape(B, C, H, W)


def init_params(key, in_channels, inter_channels):
    """Deterministic synthetic init (Conv2d 1x1 weights as (C_in, C_out) matrices)."""
    ks = jax.random.split(key, 8)
    scale = 1.0 / jnp.sqrt(in_channels)
    mk = lambda k, shp: jax.random.uniform(k, shp, jnp.float32, -scale, scale)
    C, Ci = in_channels, inter_channels
    return {
        "theta_w": mk(ks[0], (C, Ci)), "theta_b": mk(ks[1], (1, Ci)),
        "phi_w":   mk(ks[2], (C, Ci)), "phi_b":   mk(ks[3], (1, Ci)),
        "g_w":     mk(ks[4], (C, Ci)), "g_b":     mk(ks[5], (1, Ci)),
        "W_w":     mk(ks[6], (Ci, C)), "W_b":     mk(ks[7], (1, C)),
        # BatchNorm2d: nn.init.constant_(weight, 0), constant_(bias, 0);
        # running stats at their defaults (mean=0, var=1).
        "bn_gamma": jnp.zeros((1, C), jnp.float32),
        "bn_beta":  jnp.zeros((1, C), jnp.float32),
        "bn_mean":  jnp.zeros((1, C), jnp.float32),
        "bn_var":   jnp.ones((1, C), jnp.float32),
    }


if __name__ == "__main__":
    key = jax.random.PRNGKey(0)
    k_x, k_p = jax.random.split(key)

    B, C, H, W = 2, 4, 16, 16            # in_channels=4, inter_channels=None -> 4
    x = jax.random.normal(k_x, (B, C, H, W), jnp.float32)
    params = init_params(k_p, in_channels=C, inter_channels=C)

    # Test 1: module as initialized (BN gamma=beta=0 -> the block is an identity residual).
    # tq=tk=128 so the grid (2, 2, 2) exercises multi-tile online softmax.
    z = jax.block_until_ready(nonlocal_attention(x, params, tq=128, tk=128))
    z_ref = nonlocal_attention_ref(x, params)
    assert z.shape == x.shape
    assert jnp.allclose(z, x, atol=1e-5), "expected identity due to zero-init BN"
    assert jnp.allclose(z, z_ref, atol=1e-4, rtol=1e-4), "mismatch vs JAX reference"

    # Test 2: nonzero BN affine to numerically exercise the attention branch.
    # bf16 streams + MXU (f32 accumulation) -> loose tolerance vs f32 reference.
    p2 = dict(params)
    p2["bn_gamma"] = jnp.full((1, C), 0.7, jnp.float32)
    p2["bn_beta"] = jnp.linspace(-0.2, 0.2, C, dtype=jnp.float32).reshape(1, C)
    z2 = jax.block_until_ready(nonlocal_attention(x, p2, tq=128, tk=128))
    z2_ref = nonlocal_attention_ref(x, p2)
    assert jnp.allclose(z2, z2_ref, atol=1e-1, rtol=1e-1), "attention-branch mismatch"

    # Test 3: default (large-tile) path -> single kv step per q tile.
    z3 = jax.block_until_ready(nonlocal_attention(x, p2))
    assert jnp.allclose(z3, z2_ref, atol=1e-1, rtol=1e-1), "default-tile mismatch"

    print("KERNEL_OK")
</pallas_src>

<mosaic_0001>
module attributes {stable_mosaic.version = 11 : i64} {
  func.func @_nonlocal_flash_kernel(%arg0: i32, %arg1: i32, %arg2: i32, %arg3: memref<1x128x4xbf16, #tpu.memory_space<vmem>>, %arg4: memref<1x128x4xbf16, #tpu.memory_space<vmem>>, %arg5: memref<1x128x4xbf16, #tpu.memory_space<vmem>>, %arg6: memref<1x4x128xf32, #tpu.memory_space<vmem>>, %arg7: memref<4x4xbf16, #tpu.memory_space<vmem>>, %arg8: memref<4x1xf32, #tpu.memory_space<vmem>>, %arg9: memref<1x4x128xf32, #tpu.memory_space<vmem>>, %arg10: memref<128x1xf32, #tpu.memory_space<vmem>>, %arg11: memref<128x1xf32, #tpu.memory_space<vmem>>, %arg12: memref<128x4xf32, #tpu.memory_space<vmem>>) attributes {dimension_semantics = [#tpu.dimension_semantics<parallel>, #tpu.dimension_semantics<parallel>, #tpu.dimension_semantics<arbitrary>], iteration_bounds = array<i64: 2, 2, 2>, scalar_prefetch = 0 : i64, scratch_operands = 3 : i64, tpu.core_type = #tpu.core_type<tc>, window_params = [{transform_indices = @transform_0, window_bounds = array<i64: 1, 128, 4>}, {transform_indices = @transform_1, window_bounds = array<i64: 1, 128, 4>}, {transform_indices = @transform_2, window_bounds = array<i64: 1, 128, 4>}, {transform_indices = @transform_3, window_bounds = array<i64: 1, 4, 128>}, {pipeline_mode = #tpu.pipeline_mode<synchronous>, transform_indices = @transform_4, window_bounds = array<i64: 4, 4>}, {pipeline_mode = #tpu.pipeline_mode<synchronous>, transform_indices = @transform_5, window_bounds = array<i64: 4, 1>}, {transform_indices = @transform_6, window_bounds = array<i64: 1, 4, 128>}]} {
    %c0_i32 = arith.constant 0 : i32
    %0 = arith.cmpi eq, %arg2, %c0_i32 : i32
    %1 = arith.extui %0 : i1 to i32
    %c0_i32_0 = arith.constant 0 : i32
    %2 = arith.cmpi ne, %1, %c0_i32_0 : i32
    scf.if %2 {
      %cst_25 = arith.constant 0xFF800000 : f32
      %36 = vector.broadcast %cst_25 : f32 to vector<128x1xf32>
      %c0_26 = arith.constant 0 : index
      %c0_27 = arith.constant 0 : index
      %37 = vector.load %arg10[%c0_26, %c0_27] : memref<128x1xf32, #tpu.memory_space<vmem>>, vector<128x1xf32>
      tpu.vector_store %arg10[%c0_26, %c0_27], %36 {strides = array<i32>} : memref<128x1xf32, #tpu.memory_space<vmem>>, vector<128x1xf32>,
      %cst_28 = arith.constant 0.000000e+00 : f32
      %38 = vector.broadcast %cst_28 : f32 to vector<128x1xf32>
      %c0_29 = arith.constant 0 : index
      %c0_30 = arith.constant 0 : index
      %39 = vector.load %arg11[%c0_29, %c0_30] : memref<128x1xf32, #tpu.memory_space<vmem>>, vector<128x1xf32>
      tpu.vector_store %arg11[%c0_29, %c0_30], %38 {strides = array<i32>} : memref<128x1xf32, #tpu.memory_space<vmem>>, vector<128x1xf32>,
      %cst_31 = arith.constant 0.000000e+00 : f32
      %40 = vector.broadcast %cst_31 : f32 to vector<128x4xf32>
      %c0_32 = arith.constant 0 : index
      %c0_33 = arith.constant 0 : index
      %41 = vector.load %arg12[%c0_32, %c0_33] : memref<128x4xf32, #tpu.memory_space<vmem>>, vector<128x4xf32>
      tpu.vector_store %arg12[%c0_32, %c0_33], %40 {strides = array<i32>} : memref<128x4xf32, #tpu.memory_space<vmem>>, vector<128x4xf32>,
    } else {
    }
    %c0 = arith.constant 0 : index
    %c0_1 = arith.constant 0 : index
    %c0_2 = arith.constant 0 : index
    %3 = vector.load %arg3[%c0, %c0_1, %c0_2] : memref<1x128x4xbf16, #tpu.memory_space<vmem>>, vector<1x128x4xbf16>
    %4 = vector.shape_cast %3 : vector<1x128x4xbf16> to vector<128x4xbf16>
    %c0_3 = arith.constant 0 : index
    %c0_4 = arith.constant 0 : index
    %c0_5 = arith.constant 0 : index
    %5 = vector.load %arg4[%c0_3, %c0_4, %c0_5] : memref<1x128x4xbf16, #tpu.memory_space<vmem>>, vector<1x128x4xbf16>
    %6 = vector.shape_cast %5 : vector<1x128x4xbf16> to vector<128x4xbf16>
    %cst = arith.constant dense<0.000000e+00> : vector<128x128xf32>
    %7 = tpu.matmul %4, %6, %cst {dimension_numbers = #tpu.dot_dimension_numbers<[1], [1], [0], [0], [0, 0, 1, 0], [], []>} : vector<128x4xbf16>, vector<128x4xbf16>, vector<128x128xf32> -> vector<128x128xf32>
    %c0_6 = arith.constant 0 : index
    %c0_7 = arith.constant 0 : index
    %8 = vector.load %arg10[%c0_6, %c0_7] : memref<128x1xf32, #tpu.memory_space<vmem>>, vector<128x1xf32>
    %cst_8 = arith.constant dense<0xFF800000> : vector<128xf32>
    %9 = vector.multi_reduction <maximumf>, %7, %cst_8 [1] : vector<128x128xf32> to vector<128xf32>
    %10 = vector.shape_cast %9 : vector<128xf32> to vector<128x1xf32>
    %11 = arith.maximumf %8, %10 : vector<128x1xf32>
    %12 = arith.subf %8, %11 : vector<128x1xf32>
    %13 = math.exp %12 : vector<128x1xf32>
    %14 = vector.broadcast %11 : vector<128x1xf32> to vector<128x128xf32>
    %15 = arith.subf %7, %14 : vector<128x128xf32>
    %16 = math.exp %15 : vector<128x128xf32>
    %c0_9 = arith.constant 0 : index
    %c0_10 = arith.constant 0 : index
    %17 = vector.load %arg11[%c0_9, %c0_10] : memref<128x1xf32, #tpu.memory_space<vmem>>, vector<128x1xf32>
    %18 = arith.mulf %13, %17 : vector<128x1xf32>
    %cst_11 = arith.constant dense<0.000000e+00> : vector<128xf32>
    %19 = vector.multi_reduction <add>, %16, %cst_11 [1] : vector<128x128xf32> to vector<128xf32>
    %20 = vector.shape_cast %19 : vector<128xf32> to vector<128x1xf32>
    %21 = arith.addf %18, %20 : vector<128x1xf32>
    %c0_12 = arith.constant 0 : index
    %c0_13 = arith.constant 0 : index
    %22 = vector.load %arg11[%c0_12, %c0_13] : memref<128x1xf32, #tpu.memory_space<vmem>>, vector<128x1xf32>
    tpu.vector_store %arg11[%c0_12, %c0_13], %21 {strides = array<i32>} : memref<128x1xf32, #tpu.memory_space<vmem>>, vector<128x1xf32>,
    %c0_14 = arith.constant 0 : index
    %c0_15 = arith.constant 0 : index
    %23 = vector.load %arg12[%c0_14, %c0_15] : memref<128x4xf32, #tpu.memory_space<vmem>>, vector<128x4xf32>
    %24 = vector.broadcast %13 : vector<128x1xf32> to vector<128x4xf32>
    %25 = arith.mulf %24, %23 : vector<128x4xf32>
    %26 = arith.truncf %16 : vector<128x128xf32> to vector<128x128xbf16>
    %c0_16 = arith.constant 0 : index
    %c0_17 = arith.constant 0 : index
    %c0_18 = arith.constant 0 : index
    %27 = vector.load %arg5[%c0_16, %c0_17, %c0_18] : memref<1x128x4xbf16, #tpu.memory_space<vmem>>, vector<1x128x4xbf16>
    %28 = vector.shape_cast %27 : vector<1x128x4xbf16> to vector<128x4xbf16>
    %cst_19 = arith.constant dense<0.000000e+00> : vector<128x4xf32>
    %29 = tpu.matmul %26, %28, %cst_19 {dimension_numbers = #tpu.dot_dimension_numbers<[1], [0], [0], [1], [0, 0, 1, 1], [], []>} : vector<128x128xbf16>, vector<128x4xbf16>, vector<128x4xf32> -> vector<128x4xf32>
    %30 = arith.addf %25, %29 : vector<128x4xf32>
    %c0_20 = arith.constant 0 : index
    %c0_21 = arith.constant 0 : index
    %31 = vector.load %arg12[%c0_20, %c0_21] : memref<128x4xf32, #tpu.memory_space<vmem>>, vector<128x4xf32>
    tpu.vector_store %arg12[%c0_20, %c0_21], %30 {strides = array<i32>} : memref<128x4xf32, #tpu.memory_space<vmem>>, vector<128x4xf32>,
    %c0_22 = arith.constant 0 : index
    %c0_23 = arith.constant 0 : index
    %32 = vector.load %arg10[%c0_22, %c0_23] : memref<128x1xf32, #tpu.memory_space<vmem>>, vector<128x1xf32>
    tpu.vector_store %arg10[%c0_22, %c0_23], %11 {strides = array<i32>} : memref<128x1xf32, #tpu.memory_space<vmem>>, vector<128x1xf32>,
    %c1_i32 = arith.constant 1 : i32
    %33 = arith.cmpi eq, %arg2, %c1_i32 : i32
    %34 = arith.extui %33 : i1 to i32
    %c0_i32_24 = arith.constant 0 : i32
    %35 = arith.cmpi ne, %34, %c0_i32_24 : i32
    scf.if %35 {
      %c0_25 = arith.constant 0 : index
      %c0_26 = arith.constant 0 : index
      %36 = vector.load %arg12[%c0_25, %c0_26] : memref<128x4xf32, #tpu.memory_space<vmem>>, vector<128x4xf32>
      %c0_27 = arith.constant 0 : index
      %c0_28 = arith.constant 0 : index
      %37 = vector.load %arg11[%c0_27, %c0_28] : memref<128x1xf32, #tpu.memory_space<vmem>>, vector<128x1xf32>
      %38 = tpu.reciprocal %37 {approx = true} : vector<128x1xf32> -> vector<128x1xf32>
      %39 = vector.broadcast %38 : vector<128x1xf32> to vector<128x4xf32>
      %40 = arith.mulf %36, %39 : vector<128x4xf32>
      %41 = arith.truncf %40 : vector<128x4xf32> to vector<128x4xbf16>
      %c0_29 = arith.constant 0 : index
      %c0_30 = arith.constant 0 : index
      %42 = vector.load %arg7[%c0_29, %c0_30] : memref<4x4xbf16, #tpu.memory_space<vmem>>, vector<4x4xbf16>
      %cst_31 = arith.constant dense<0.000000e+00> : vector<4x128xf32>
      %43 = tpu.matmul %42, %41, %cst_31 {dimension_numbers = #tpu.dot_dimension_numbers<[1], [1], [0], [0], [0, 0, 1, 0], [], []>} : vector<4x4xbf16>, vector<128x4xbf16>, vector<4x128xf32> -> vector<4x128xf32>
      %c0_32 = arith.constant 0 : index
      %c0_33 = arith.constant 0 : index
      %44 = vector.load %arg8[%c0_32, %c0_33] : memref<4x1xf32, #tpu.memory_space<vmem>>, vector<4x1xf32>
      %45 = vector.broadcast %44 : vector<4x1xf32> to vector<4x128xf32>
      %46 = arith.addf %43, %45 : vector<4x128xf32>
      %c0_34 = arith.constant 0 : index
      %c0_35 = arith.constant 0 : index
      %c0_36 = arith.constant 0 : index
      %47 = vector.load %arg6[%c0_34, %c0_35, %c0_36] : memref<1x4x128xf32, #tpu.memory_space<vmem>>, vector<1x4x128xf32>
      %48 = vector.shape_cast %47 : vector<1x4x128xf32> to vector<4x128xf32>
      %49 = arith.addf %46, %48 : vector<4x128xf32>
      %c0_37 = arith.constant 0 : index
      %c0_38 = arith.constant 0 : index
      %c0_39 = arith.constant 0 : index
      %50 = vector.load %arg9[%c0_37, %c0_38, %c0_39] : memref<1x4x128xf32, #tpu.memory_space<vmem>>, vector<1x4x128xf32>
      %51 = vector.shape_cast %50 : vector<1x4x128xf32> to vector<4x128xf32>
      %52 = vector.shape_cast %49 : vector<4x128xf32> to vector<1x4x128xf32>
      tpu.vector_store %arg9[%c0_37, %c0_38, %c0_39], %52 {strides = array<i32>} : memref<1x4x128xf32, #tpu.memory_space<vmem>>, vector<1x4x128xf32>,
    } else {
    }
    return
  }
  func.func @transform_0(%arg0: i32, %arg1: i32, %arg2: i32) -> (i32, i32, i32) {
    %c0_i32 = arith.constant 0 : i32
    %c0_i32_0 = arith.constant 0 : i32
    return %arg0, %arg1, %c0_i32 : i32, i32, i32
  }
  func.func @transform_1(%arg0: i32, %arg1: i32, %arg2: i32) -> (i32, i32, i32) {
    %c0_i32 = arith.constant 0 : i32
    %c0_i32_0 = arith.constant 0 : i32
    return %arg0, %arg2, %c0_i32 : i32, i32, i32
  }
  func.func @transform_2(%arg0: i32, %arg1: i32, %arg2: i32) -> (i32, i32, i32) {
    %c0_i32 = arith.constant 0 : i32
    %c0_i32_0 = arith.constant 0 : i32
    return %arg0, %arg2, %c0_i32 : i32, i32, i32
  }
  func.func @transform_3(%arg0: i32, %arg1: i32, %arg2: i32) -> (i32, i32, i32) {
    %c0_i32 = arith.constant 0 : i32
    %c0_i32_0 = arith.constant 0 : i32
    return %arg0, %c0_i32, %arg1 : i32, i32, i32
  }
  func.func @transform_4(%arg0: i32, %arg1: i32, %arg2: i32) -> (i32, i32) {
    %c0_i32 = arith.constant 0 : i32
    %c0_i32_0 = arith.constant 0 : i32
    %c0_i32_1 = arith.constant 0 : i32
    return %c0_i32, %c0_i32_0 : i32, i32
  }
  func.func @transform_5(%arg0: i32, %arg1: i32, %arg2: i32) -> (i32, i32) {
    %c0_i32 = arith.constant 0 : i32
    %c0_i32_0 = arith.constant 0 : i32
    %c0_i32_1 = arith.constant 0 : i32
    return %c0_i32, %c0_i32_0 : i32, i32
  }
  func.func @transform_6(%arg0: i32, %arg1: i32, %arg2: i32) -> (i32, i32, i32) {
    %c0_i32 = arith.constant 0 : i32
    %c0_i32_0 = arith.constant 0 : i32
    return %arg0, %c0_i32, %arg1 : i32, i32, i32
  }
}

</mosaic_0001>

<llo_original>
// kernel: tpu_custom_call.1
$region0: #{tpu_custom_call.1}
  #allocation0 [shape = 'u32[]', space=smem, size = 0x4, offset = 0x4, fixed_abs, tag = 'smem constant byte address 0x4 - core index']
  #allocation1 [shape = 'u32[144,128]{1,0:T(1,128)}', space=vmem, size = 0x12000, scoped, tag = 'internal scratch']
  #allocation2 [shape = 'f32[128,1]{1,0:T(8,128)}', space=vmem, size = 0x10000, scoped, tag = 'scratch operand']
  #allocation3 [shape = 'f32[128,1]{1,0:T(8,128)}', space=vmem, size = 0x10000, scoped, tag = 'scratch operand']
  #allocation4 [shape = 'f32[128,4]{1,0:T(8,128)}', space=vmem, size = 0x10000, scoped, tag = 'scratch operand']
  %s0 = inlined_call_operand.vmem [shape: bf16[2,256,4], index: 0, kind: input, shape index: {}]
  %s1 = inlined_call_operand.vmem [shape: bf16[2,256,4], index: 1, kind: input, shape index: {}]
  %s2 = inlined_call_operand.vmem [shape: bf16[2,256,4], index: 2, kind: input, shape index: {}]
  %s3 = inlined_call_operand.vmem [shape: f32[2,4,256], index: 3, kind: input, shape index: {}]
  %s4 = inlined_call_operand.vmem [shape: bf16[4,4], index: 4, kind: input, shape index: {}]
  %s5 = inlined_call_operand.vmem [shape: f32[4,1], index: 5, kind: input, shape index: {}]
  %s6 = inlined_call_operand.hbm [shape: f32[2,4,256], index: 6, kind: output, shape index: {}]
  %s7 = sld [smem:[#allocation0]]
  $region65: #{tpu_custom_call.1} parent=0
    _
  %s9 = ssub.s32 1, %s7
  %s10 = scalar_select 0, %s9, %s7
  $region1: #{tpu_custom_call.1} parent=0
    #allocation5 [shape = 'u8[4096]{0}', space=vmem, size = 0x1000, scoped, tag = 'output window, operand 0']
    #allocation6 [shape = 's32[2]{0}', space=sflag, size = 0x8, scoped, tag = 'scoped memory for tpu_custom_call.1']
    %11 = vsyncpa [#allocation6], 0
    %s12 = scalar_lea.sflag [#allocation6], 1
    %13 = vsyncpa %s12, 0
    loop: start=0, step=1, limit=10
    $region2: #{tpu_custom_call.1} parent=1 // loop_pre_header
      _
    $region3: #{tpu_custom_call.1} parent=1 // loop_header
      %s15 = sphi 0, %s19
      %p16 = scmp.ge.s32.totalorder %s15, 10
      %s22 = sphi 0, %s41
      %s23 = sphi 0, %s37
      %s24 = sphi 0, %s33
      %s25 = sphi 0, %s22
      %s26 = sphi 0, %s23
      %s27 = sphi 0, %s24
      %s28 = sphi 0, %s25
      %s29 = sphi 0, %s26
      %s30 = sphi 0, %s27
      %s46 = sphi 0, %s48
      %s49 = sphi 0, %s46
      %s50 = sphi 0, %s49
      %s66 = sphi 0, %s50
      %s74 = sphi 0, %s76
      %s77 = sphi 0, %s74
      %s78 = sphi 0, %s77
      %s94 = sphi 0, %s78
      %s102 = sphi 0, %s104
      %s105 = sphi 0, %s102
      %s106 = sphi 0, %s105
      %s122 = sphi 0, %s106
      %s130 = sphi 0, %s132
      %s133 = sphi 0, %s130
      %s134 = sphi 0, %s133
      %s150 = sphi 0, %s134
      %s154 = sphi 0, %s154
      %s156 = sphi 0, %s154
      %s157 = sphi 0, %s156
      %s171 = sphi 0, %s157
      %s175 = sphi 0, %s175
      %s177 = sphi 0, %s175
      %s178 = sphi 0, %s177
      %s192 = sphi 0, %s178
      %s200 = sphi 0, %s202
      %s203 = sphi 0, %s200
      %s204 = sphi 0, %s203
      %s220 = sphi 0, %s204
    $region4: #{tpu_custom_call.1} parent=1 // loop_header_branch
      %18 = sbr.rel (%p16) target = $region8
    $region5: #{tpu_custom_call.1} parent=1 // loop_body
      %s20 = ssub.s32 %s15, 1
      %s21 = ssub.s32 %s15, 2
      %s31 = sadd.s32 1, %s24
      %p32 = scmp.ge.s32.totalorder %s31, 2
      %s33 = scalar_select %p32, 0, %s31
      %s34 = sadd.s32 1, %s23
      %s35 = scalar_select %p32, %s34, %s23
      %p36 = scmp.ge.s32.totalorder %s35, 2
      %s37 = scalar_select %p36, 0, %s35
      %s38 = sadd.s32 1, %s22
      %s39 = scalar_select %p36, %s38, %s22
      %p40 = scmp.ge.s32.totalorder %s39, 2
      %s41 = scalar_select %p40, 0, %s39
      %s42 = ssub.s32 %s22, %s41
      %s43 = ssub.s32 %s23, %s37
      %s44 = sor.u32 %s42, %s43
      %p45 = scmp.eq.s32.totalorder %s44, 0
      %s47 = sadd.s32 %s46, 1
      %s48 = scalar_select %p45, %s46, %s47
      %p51 = pneg %p45
      %p52 = scmp.eq.s32.totalorder %s15, 7
      %p53 = por %p51, %p52
      %p54 = scmp.ne.s32.totalorder %s46, %s49
      %p55 = scmp.eq.s32.totalorder %s15, 0
      %p56 = por %p54, %p55
      %p57 = scmp.ne.s32.totalorder %s46, %s49
      %p58 = scmp.eq.s32.totalorder %s20, 7
      %p59 = por %p57, %p58
      %p60 = scmp.ne.s32.totalorder %s49, %s50
      %p61 = scmp.eq.s32.totalorder %s20, 0
      %p62 = por %p60, %p61
      %p63 = scmp.ne.s32.totalorder %s49, %s50
      %p64 = scmp.eq.s32.totalorder %s21, 7
      %p65 = por %p63, %p64
      %p67 = scmp.ne.s32.totalorder %s50, %s66
      %p68 = scmp.eq.s32.totalorder %s21, 0
      %p69 = por %p67, %p68
      %s70 = ssub.s32 %s22, %s41
      %s71 = ssub.s32 %s24, %s33
      %s72 = sor.u32 %s70, %s71
      %p73 = scmp.eq.s32.totalorder %s72, 0
      %s75 = sadd.s32 %s74, 1
      %s76 = scalar_select %p73, %s74, %s75
      %p79 = pneg %p73
      %p80 = scmp.eq.s32.totalorder %s15, 7
      %p81 = por %p79, %p80
      %p82 = scmp.ne.s32.totalorder %s74, %s77
      %p83 = scmp.eq.s32.totalorder %s15, 0
      %p84 = por %p82, %p83
      %p85 = scmp.ne.s32.totalorder %s74, %s77
      %p86 = scmp.eq.s32.totalorder %s20, 7
      %p87 = por %p85, %p86
      %p88 = scmp.ne.s32.totalorder %s77, %s78
      %p89 = scmp.eq.s32.totalorder %s20, 0
      %p90 = por %p88, %p89
      %p91 = scmp.ne.s32.totalorder %s77, %s78
      %p92 = scmp.eq.s32.totalorder %s21, 7
      %p93 = por %p91, %p92
      %p95 = scmp.ne.s32.totalorder %s78, %s94
      %p96 = scmp.eq.s32.totalorder %s21, 0
      %p97 = por %p95, %p96
      %s98 = ssub.s32 %s22, %s41
      %s99 = ssub.s32 %s24, %s33
      %s100 = sor.u32 %s98, %s99
      %p101 = scmp.eq.s32.totalorder %s100, 0
      %s103 = sadd.s32 %s102, 1
      %s104 = scalar_select %p101, %s102, %s103
      %p107 = pneg %p101
      %p108 = scmp.eq.s32.totalorder %s15, 7
      %p109 = por %p107, %p108
      %p110 = scmp.ne.s32.totalorder %s102, %s105
      %p111 = scmp.eq.s32.totalorder %s15, 0
      %p112 = por %p110, %p111
      %p113 = scmp.ne.s32.totalorder %s102, %s105
      %p114 = scmp.eq.s32.totalorder %s20, 7
      %p115 = por %p113, %p114
      %p116 = scmp.ne.s32.totalorder %s105, %s106
      %p117 = scmp.eq.s32.totalorder %s20, 0
      %p118 = por %p116, %p117
      %p119 = scmp.ne.s32.totalorder %s105, %s106
      %p120 = scmp.eq.s32.totalorder %s21, 7
      %p121 = por %p119, %p120
      %p123 = scmp.ne.s32.totalorder %s106, %s122
      %p124 = scmp.eq.s32.totalorder %s21, 0
      %p125 = por %p123, %p124
      %s126 = ssub.s32 %s22, %s41
      %s127 = ssub.s32 %s23, %s37
      %s128 = sor.u32 %s126, %s127
      %p129 = scmp.eq.s32.totalorder %s128, 0
      %s131 = sadd.s32 %s130, 1
      %s132 = scalar_select %p129, %s130, %s131
      %p135 = pneg %p129
      %p136 = scmp.eq.s32.totalorder %s15, 7
      %p137 = por %p135, %p136
      %p138 = scmp.ne.s32.totalorder %s130, %s133
      %p139 = scmp.eq.s32.totalorder %s15, 0
      %p140 = por %p138, %p139
      %p141 = scmp.ne.s32.totalorder %s130, %s133
      %p142 = scmp.eq.s32.totalorder %s20, 7
      %p143 = por %p141, %p142
      %p144 = scmp.ne.s32.totalorder %s133, %s134
      %p145 = scmp.eq.s32.totalorder %s20, 0
      %p146 = por %p144, %p145
      %p147 = scmp.ne.s32.totalorder %s133, %s134
      %p148 = scmp.eq.s32.totalorder %s21, 7
      %p149 = por %p147, %p148
      %p151 = scmp.ne.s32.totalorder %s134, %s150
      %p152 = scmp.eq.s32.totalorder %s21, 0
      %p153 = por %p151, %p152
      %s155 = sadd.s32 %s154, 1
      %p158 = scmp.eq.s32.totalorder %s15, 7
      %p159 = scmp.ne.s32.totalorder %s154, %s156
      %p160 = scmp.eq.s32.totalorder %s15, 0
      %p161 = por %p159, %p160
      %p162 = scmp.ne.s32.totalorder %s154, %s156
      %p163 = scmp.eq.s32.totalorder %s20, 7
      %p164 = por %p162, %p163
      %p165 = scmp.ne.s32.totalorder %s156, %s157
      %p166 = scmp.eq.s32.totalorder %s20, 0
      %p167 = por %p165, %p166
      %p168 = scmp.ne.s32.totalorder %s156, %s157
      %p169 = scmp.eq.s32.totalorder %s21, 7
      %p170 = por %p168, %p169
      %p172 = scmp.ne.s32.totalorder %s157, %s171
      %p173 = scmp.eq.s32.totalorder %s21, 0
      %p174 = por %p172, %p173
      %s176 = sadd.s32 %s175, 1
      %p179 = scmp.eq.s32.totalorder %s15, 7
      %p180 = scmp.ne.s32.totalorder %s175, %s177
      %p181 = scmp.eq.s32.totalorder %s15, 0
      %p182 = por %p180, %p181
      %p183 = scmp.ne.s32.totalorder %s175, %s177
      %p184 = scmp.eq.s32.totalorder %s20, 7
      %p185 = por %p183, %p184
      %p186 = scmp.ne.s32.totalorder %s177, %s178
      %p187 = scmp.eq.s32.totalorder %s20, 0
      %p188 = por %p186, %p187
      %p189 = scmp.ne.s32.totalorder %s177, %s178
      %p190 = scmp.eq.s32.totalorder %s21, 7
      %p191 = por %p189, %p190
      %p193 = scmp.ne.s32.totalorder %s178, %s192
      %p194 = scmp.eq.s32.totalorder %s21, 0
      %p195 = por %p193, %p194
      %s196 = ssub.s32 %s22, %s41
      %s197 = ssub.s32 %s23, %s37
      %s198 = sor.u32 %s196, %s197
      %p199 = scmp.eq.s32.totalorder %s198, 0
      %s201 = sadd.s32 %s200, 1
      %s202 = scalar_select %p199, %s200, %s201
      %p205 = pneg %p199
      %p206 = scmp.eq.s32.totalorder %s15, 7
      %p207 = por %p205, %p206
      %p208 = scmp.ne.s32.totalorder %s200, %s203
      %p209 = scmp.eq.s32.totalorder %s15, 0
      %p210 = por %p208, %p209
      %p211 = scmp.ne.s32.totalorder %s200, %s203
      %p212 = scmp.eq.s32.totalorder %s20, 7
      %p213 = por %p211, %p212
      %p214 = scmp.ne.s32.totalorder %s203, %s204
      %p215 = scmp.eq.s32.totalorder %s20, 0
      %p216 = por %p214, %p215
      %p217 = scmp.ne.s32.totalorder %s203, %s204
      %p218 = scmp.eq.s32.totalorder %s21, 7
      %p219 = por %p217, %p218
      %p221 = scmp.ne.s32.totalorder %s204, %s220
      %p222 = scmp.eq.s32.totalorder %s21, 0
      %p223 = por %p221, %p222
      %p224 = scmp.le.s32.totalorder 1, %s15
      %p225 = scmp.lt.s32.totalorder %s15, 9
      %p226 = pnand %p224, %p225
      %p227 = pneg %p226
      // Predicated region
      $region9: #{tpu_custom_call.1} parent=5 // pred_check
        _
      $region10: #{tpu_custom_call.1} parent=5 // pred_check_branch
        %229 = sbr.rel (%p226) target = $region12
      $region11: #{tpu_custom_call.1} parent=5 // pred_region
        %s230 = ssub.s32 %s15, 1
        // Predicated region
        $region13: #{tpu_custom_call.1} parent=11 // pred_check
          %p231 = pneg %p167
        $region14: #{tpu_custom_call.1} parent=11 // pred_check_branch
          %233 = sbr.rel (%p231) target = $region16
        $region15: #{tpu_custom_call.1} parent=11 // pred_region
          _
        $region16: #{tpu_custom_call.1} parent=11 // pred_fallthru
          _
        // Predicated region
        $region17: #{tpu_custom_call.1} parent=11 // pred_check
          %p234 = pneg %p188
        $region18: #{tpu_custom_call.1} parent=11 // pred_check_branch
          %236 = sbr.rel (%p234) target = $region20
        $region19: #{tpu_custom_call.1} parent=11 // pred_region
          _
        $region20: #{tpu_custom_call.1} parent=11 // pred_fallthru
          _
      $region12: #{tpu_custom_call.1} parent=5 // pred_fallthru
        _
      %p237 = scmp.lt.s32.totalorder %s15, 8
      // Predicated region
      $region21: #{tpu_custom_call.1} parent=5 // pred_check
        %p238 = pneg %p237
      $region22: #{tpu_custom_call.1} parent=5 // pred_check_branch
        %240 = sbr.rel (%p238) target = $region24
      $region23: #{tpu_custom_call.1} parent=5 // pred_region
        // Predicated region
        $region25: #{tpu_custom_call.1} parent=23 // pred_check
          %p241 = pneg %p56
        $region26: #{tpu_custom_call.1} parent=23 // pred_check_branch
          %243 = sbr.rel (%p241) target = $region28
        $region27: #{tpu_custom_call.1} parent=23 // pred_region
          %s244 = smul.u32 16, %s23
          %p245 = scmp.lt.s32.totalorder %s22, 1
          %s246 = scalar_select %p245, %s22, 1
          %p247 = scmp.lt.s32.totalorder %s244, 31
          %s248 = scalar_select %p247, %s244, 31
          %s249 = smul.addr %s246, 32
          %s250 = sadd.s32 %s248, %s249
          %s251 = smul.addr %s250, 4
          %s252 = scalar_lea.vmem %s0, %s251
          %s253 = smul.u32 16, %s23
        $region28: #{tpu_custom_call.1} parent=23 // pred_fallthru
          _
        // Predicated region
        $region29: #{tpu_custom_call.1} parent=23 // pred_check
          %p254 = pneg %p84
        $region30: #{tpu_custom_call.1} parent=23 // pred_check_branch
          %256 = sbr.rel (%p254) target = $region32
        $region31: #{tpu_custom_call.1} parent=23 // pred_region
          %s257 = smul.u32 16, %s24
          %p258 = scmp.lt.s32.totalorder %s22, 1
          %s259 = scalar_select %p258, %s22, 1
          %p260 = scmp.lt.s32.totalorder %s257, 31
          %s261 = scalar_select %p260, %s257, 31
          %s262 = smul.addr %s259, 32
          %s263 = sadd.s32 %s261, %s262
          %s264 = smul.addr %s263, 4
          %s265 = scalar_lea.vmem %s1, %s264
          %s266 = smul.u32 16, %s24
        $region32: #{tpu_custom_call.1} parent=23 // pred_fallthru
          _
        // Predicated region
        $region33: #{tpu_custom_call.1} parent=23 // pred_check
          %p267 = pneg %p112
        $region34: #{tpu_custom_call.1} parent=23 // pred_check_branch
          %269 = sbr.rel (%p267) target = $region36
        $region35: #{tpu_custom_call.1} parent=23 // pred_region
          %s270 = smul.u32 16, %s24
          %p271 = scmp.lt.s32.totalorder %s22, 1
          %s272 = scalar_select %p271, %s22, 1
          %p273 = scmp.lt.s32.totalorder %s270, 31
          %s274 = scalar_select %p273, %s270, 31
          %s275 = smul.addr %s272, 32
          %s276 = sadd.s32 %s274, %s275
          %s277 = smul.addr %s276, 4
          %s278 = scalar_lea.vmem %s2, %s277
          %s279 = smul.u32 16, %s24
        $region36: #{tpu_custom_call.1} parent=23 // pred_fallthru
          _
        // Predicated region
        $region37: #{tpu_custom_call.1} parent=23 // pred_check
          %p280 = pneg %p140
        $region38: #{tpu_custom_call.1} parent=23 // pred_check_branch
          %282 = sbr.rel (%p280) target = $region40
        $region39: #{tpu_custom_call.1} parent=23 // pred_region
          %p283 = scmp.lt.s32.totalorder %s22, 1
          %s284 = scalar_select %p283, %s22, 1
          %p285 = scmp.lt.s32.totalorder %s23, 1
          %s286 = scalar_select %p285, %s23, 1
          %s287 = smul.addr %s284, 2
          %s288 = sadd.s32 %s286, %s287
          %s289 = smul.addr %s288, 4
          %s290 = scalar_lea.vmem %s3, %s289
        $region40: #{tpu_custom_call.1} parent=23 // pred_fallthru
          _
      $region24: #{tpu_custom_call.1} parent=5 // pred_fallthru
        _
      %p291 = scmp.le.s32.totalorder 1, %s15
      %p292 = scmp.lt.s32.totalorder %s15, 9
      %p293 = pnand %p291, %p292
      %p294 = pneg %p293
      // Predicated region
      $region41: #{tpu_custom_call.1} parent=5 // pred_check
        _
      $region42: #{tpu_custom_call.1} parent=5 // pred_check_branch
        %296 = sbr.rel (%p293) target = $region44
      $region43: #{tpu_custom_call.1} parent=5 // pred_region
        %s297 = ssub.s32 %s15, 1
        %s298 = smul.u32 16, %s26
        %p299 = scmp.lt.s32.totalorder %s25, 1
        %s300 = scalar_select %p299, %s25, 1
        %p301 = scmp.lt.s32.totalorder %s298, 31
        %s302 = scalar_select %p301, %s298, 31
        %s303 = smul.addr %s300, 32
        %s304 = sadd.s32 %s302, %s303
        %s305 = smul.addr %s304, 4
        %s306 = scalar_lea.vmem %s0, %s305
        %p307 = pneg %p62
        %p308 = pneg %p59
        %s309 = smul.u32 16, %s27
        %p310 = scmp.lt.s32.totalorder %s25, 1
        %s311 = scalar_select %p310, %s25, 1
        %p312 = scmp.lt.s32.totalorder %s309, 31
        %s313 = scalar_select %p312, %s309, 31
        %s314 = smul.addr %s311, 32
        %s315 = sadd.s32 %s313, %s314
        %s316 = smul.addr %s315, 4
        %s317 = scalar_lea.vmem %s1, %s316
        %p318 = pneg %p90
        %p319 = pneg %p87
        %s320 = smul.u32 16, %s27
        %p321 = scmp.lt.s32.totalorder %s25, 1
        %s322 = scalar_select %p321, %s25, 1
        %p323 = scmp.lt.s32.totalorder %s320, 31
        %s324 = scalar_select %p323, %s320, 31
        %s325 = smul.addr %s322, 32
        %s326 = sadd.s32 %s324, %s325
        %s327 = smul.addr %s326, 4
        %s328 = scalar_lea.vmem %s2, %s327
        %p329 = pneg %p118
        %p330 = pneg %p115
        %p331 = scmp.lt.s32.totalorder %s25, 1
        %s332 = scalar_select %p331, %s25, 1
        %p333 = scmp.lt.s32.totalorder %s26, 1
        %s334 = scalar_select %p333, %s26, 1
        %s335 = smul.addr %s332, 2
        %s336 = sadd.s32 %s334, %s335
        %s337 = smul.addr %s336, 4
        %s338 = scalar_lea.vmem %s3, %s337
        %p339 = pneg %p146
        %p340 = pneg %p143
        %p341 = pneg %p167
        %p342 = pneg %p164
        %p343 = pneg %p188
        %p344 = pneg %p185
        %p345 = pneg %p216
        %p346 = pneg %p213
        %s347 = sand.u32 %s203, 1
        %s348 = scalar_lea.sflag [#allocation6], %s347
        %s349 = sand.u32 %s203, 1
        %s350 = smul.addr %s349, 4
        %s351 = scalar_lea.vmem [#allocation5], %s350
        %s352 = smul.u32 16, %s26
        %p353 = scmp.lt.s32.totalorder %s25, 1
        %s354 = scalar_select %p353, %s25, 1
        %p355 = scmp.lt.s32.totalorder %s352, 31
        %s356 = scalar_select %p355, %s352, 31
        %s357 = smul.addr %s354, 32
        %s358 = sadd.s32 %s356, %s357
        %s359 = smul.addr %s358, 4
        %s360 = scalar_lea.vmem %s0, %s359
        %s361 = smul.u32 16, %s26
        %s362 = smul.u32 16, %s27
        %p363 = scmp.lt.s32.totalorder %s25, 1
        %s364 = scalar_select %p363, %s25, 1
        %p365 = scmp.lt.s32.totalorder %s362, 31
        %s366 = scalar_select %p365, %s362, 31
        %s367 = smul.addr %s364, 32
        %s368 = sadd.s32 %s366, %s367
        %s369 = smul.addr %s368, 4
        %s370 = scalar_lea.vmem %s1, %s369
        %s371 = smul.u32 16, %s27
        %s372 = smul.u32 16, %s27
        %p373 = scmp.lt.s32.totalorder %s25, 1
        %s374 = scalar_select %p373, %s25, 1
        %p375 = scmp.lt.s32.totalorder %s372, 31
        %s376 = scalar_select %p375, %s372, 31
        %s377 = smul.addr %s374, 32
        %s378 = sadd.s32 %s376, %s377
        %s379 = smul.addr %s378, 4
        %s380 = scalar_lea.vmem %s2, %s379
        %s381 = smul.u32 16, %s27
        %p382 = scmp.lt.s32.totalorder %s25, 1
        %s383 = scalar_select %p382, %s25, 1
        %p384 = scmp.lt.s32.totalorder %s26, 1
        %s385 = scalar_select %p384, %s26, 1
        %s386 = smul.addr %s383, 2
        %s387 = sadd.s32 %s385, %s386
        %s388 = smul.addr %s387, 4
        %s389 = scalar_lea.vmem %s3, %s388
        %p391 = scmp.eq.s32.totalorder %s27, 0
        // Predicated region
        $region45: #{tpu_custom_call.1} parent=43 // pred_check
          %p392 = pneg %p391
        $region46: #{tpu_custom_call.1} parent=43 // pred_check_branch
          %394 = sbr.rel (%p392) target = $region48
        $region47: #{tpu_custom_call.1} parent=43 // pred_region
          %vm395 = vcmask 7168
          %396 = vst.msk [vmem:[#allocation2] sm:$0xff] %vm395, -inf
          %397 = vst.msk [vmem:[#allocation2 + $0x8] sm:$0xff] %vm395, -inf
          %398 = vst.msk [vmem:[#allocation2 + $0x10] sm:$0xff] %vm395, -inf
          %399 = vst.msk [vmem:[#allocation2 + $0x18] sm:$0xff] %vm395, -inf
          %400 = vst.msk [vmem:[#allocation2 + $0x20] sm:$0xff] %vm395, -inf
          %401 = vst.msk [vmem:[#allocation2 + $0x28] sm:$0xff] %vm395, -inf
          %402 = vst.msk [vmem:[#allocation2 + $0x30] sm:$0xff] %vm395, -inf
          %403 = vst.msk [vmem:[#allocation2 + $0x38] sm:$0xff] %vm395, -inf
          %404 = vst.msk [vmem:[#allocation2 + $0x40] sm:$0xff] %vm395, -inf
          %405 = vst.msk [vmem:[#allocation2 + $0x48] sm:$0xff] %vm395, -inf
          %406 = vst.msk [vmem:[#allocation2 + $0x50] sm:$0xff] %vm395, -inf
          %407 = vst.msk [vmem:[#allocation2 + $0x58] sm:$0xff] %vm395, -inf
          %408 = vst.msk [vmem:[#allocation2 + $0x60] sm:$0xff] %vm395, -inf
          %409 = vst.msk [vmem:[#allocation2 + $0x68] sm:$0xff] %vm395, -inf
          %410 = vst.msk [vmem:[#allocation2 + $0x70] sm:$0xff] %vm395, -inf
          %411 = vst.msk [vmem:[#allocation2 + $0x78] sm:$0xff] %vm395, -inf
          %412 = vst.msk [vmem:[#allocation3] sm:$0xff] %vm395, 0.0
          %413 = vst.msk [vmem:[#allocation3 + $0x8] sm:$0xff] %vm395, 0.0
          %414 = vst.msk [vmem:[#allocation3 + $0x10] sm:$0xff] %vm395, 0.0
          %415 = vst.msk [vmem:[#allocation3 + $0x18] sm:$0xff] %vm395, 0.0
          %416 = vst.msk [vmem:[#allocation3 + $0x20] sm:$0xff] %vm395, 0.0
          %417 = vst.msk [vmem:[#allocation3 + $0x28] sm:$0xff] %vm395, 0.0
          %418 = vst.msk [vmem:[#allocation3 + $0x30] sm:$0xff] %vm395, 0.0
          %419 = vst.msk [vmem:[#allocation3 + $0x38] sm:$0xff] %vm395, 0.0
          %420 = vst.msk [vmem:[#allocation3 + $0x40] sm:$0xff] %vm395, 0.0
          %421 = vst.msk [vmem:[#allocation3 + $0x48] sm:$0xff] %vm395, 0.0
          %422 = vst.msk [vmem:[#allocation3 + $0x50] sm:$0xff] %vm395, 0.0
          %423 = vst.msk [vmem:[#allocation3 + $0x58] sm:$0xff] %vm395, 0.0
          %424 = vst.msk [vmem:[#allocation3 + $0x60] sm:$0xff] %vm395, 0.0
          %425 = vst.msk [vmem:[#allocation3 + $0x68] sm:$0xff] %vm395, 0.0
          %426 = vst.msk [vmem:[#allocation3 + $0x70] sm:$0xff] %vm395, 0.0
          %427 = vst.msk [vmem:[#allocation3 + $0x78] sm:$0xff] %vm395, 0.0
          %vm428 = vcmask 31744
          %429 = vst.msk [vmem:[#allocation4] sm:$0xff] %vm428, 0.0
          %430 = vst.msk [vmem:[#allocation4 + $0x8] sm:$0xff] %vm428, 0.0
          %431 = vst.msk [vmem:[#allocation4 + $0x10] sm:$0xff] %vm428, 0.0
          %432 = vst.msk [vmem:[#allocation4 + $0x18] sm:$0xff] %vm428, 0.0
          %433 = vst.msk [vmem:[#allocation4 + $0x20] sm:$0xff] %vm428, 0.0
          %434 = vst.msk [vmem:[#allocation4 + $0x28] sm:$0xff] %vm428, 0.0
          %435 = vst.msk [vmem:[#allocation4 + $0x30] sm:$0xff] %vm428, 0.0
          %436 = vst.msk [vmem:[#allocation4 + $0x38] sm:$0xff] %vm428, 0.0
          %437 = vst.msk [vmem:[#allocation4 + $0x40] sm:$0xff] %vm428, 0.0
          %438 = vst.msk [vmem:[#allocation4 + $0x48] sm:$0xff] %vm428, 0.0
          %439 = vst.msk [vmem:[#allocation4 + $0x50] sm:$0xff] %vm428, 0.0
          %440 = vst.msk [vmem:[#allocation4 + $0x58] sm:$0xff] %vm428, 0.0
          %441 = vst.msk [vmem:[#allocation4 + $0x60] sm:$0xff] %vm428, 0.0
          %442 = vst.msk [vmem:[#allocation4 + $0x68] sm:$0xff] %vm428, 0.0
          %443 = vst.msk [vmem:[#allocation4 + $0x70] sm:$0xff] %vm428, 0.0
          %444 = vst.msk [vmem:[#allocation4 + $0x78] sm:$0xff] %vm428, 0.0
        $region48: #{tpu_custom_call.1} parent=43 // pred_fallthru
          _
        %v445 = vld [vmem:[%s360] sm:$0xf]
        %v446 = vld [vmem:[%s360 + $0x4] sm:$0xf]
        %v447 = vld [vmem:[%s360 + $0x8] sm:$0xf]
        %v448 = vld [vmem:[%s360 + $0xc] sm:$0xf]
        %v449 = vld [vmem:[%s360 + $0x10] sm:$0xf]
        %v450 = vld [vmem:[%s360 + $0x14] sm:$0xf]
        %v451 = vld [vmem:[%s360 + $0x18] sm:$0xf]
        %v452 = vld [vmem:[%s360 + $0x1c] sm:$0xf]
        %v453 = vld [vmem:[%s360 + $0x20] sm:$0xf]
        %v454 = vld [vmem:[%s360 + $0x24] sm:$0xf]
        %v455 = vld [vmem:[%s360 + $0x28] sm:$0xf]
        %v456 = vld [vmem:[%s360 + $0x2c] sm:$0xf]
        %v457 = vld [vmem:[%s360 + $0x30] sm:$0xf]
        %v458 = vld [vmem:[%s360 + $0x34] sm:$0xf]
        %v459 = vld [vmem:[%s360 + $0x38] sm:$0xf]
        %v460 = vld [vmem:[%s360 + $0x3c] sm:$0xf]
        %v461 = vld [vmem:[%s370] sm:$0xf]
        %v462 = vld [vmem:[%s370 + $0x4] sm:$0xf]
        %v463 = vld [vmem:[%s370 + $0x8] sm:$0xf]
        %v464 = vld [vmem:[%s370 + $0xc] sm:$0xf]
        %v465 = vld [vmem:[%s370 + $0x10] sm:$0xf]
        %v466 = vld [vmem:[%s370 + $0x14] sm:$0xf]
        %v467 = vld [vmem:[%s370 + $0x18] sm:$0xf]
        %v468 = vld [vmem:[%s370 + $0x1c] sm:$0xf]
        %v469 = vld [vmem:[%s370 + $0x20] sm:$0xf]
        %v470 = vld [vmem:[%s370 + $0x24] sm:$0xf]
        %v471 = vld [vmem:[%s370 + $0x28] sm:$0xf]
        %v472 = vld [vmem:[%s370 + $0x2c] sm:$0xf]
        %v473 = vld [vmem:[%s370 + $0x30] sm:$0xf]
        %v474 = vld [vmem:[%s370 + $0x34] sm:$0xf]
        %v475 = vld [vmem:[%s370 + $0x38] sm:$0xf]
        %v476 = vld [vmem:[%s370 + $0x3c] sm:$0xf]
        %v493 = vunpack.c.l.b16 %v445
        %v494 = vunpack.c.l.b16 %v446
        %v495 = vunpack.c.l.b16 %v447
        %v496 = vunpack.c.l.b16 %v448
        %v497 = vunpack.c.l.b16 %v449
        %v498 = vunpack.c.l.b16 %v450
        %v499 = vunpack.c.l.b16 %v451
        %v500 = vunpack.c.l.b16 %v452
        %v501 = vunpack.c.l.b16 %v453
        %v502 = vunpack.c.l.b16 %v454
        %v503 = vunpack.c.l.b16 %v455
        %v504 = vunpack.c.l.b16 %v456
        %v505 = vunpack.c.l.b16 %v457
        %v506 = vunpack.c.l.b16 %v458
        %v507 = vunpack.c.l.b16 %v459
        %v508 = vunpack.c.l.b16 %v460
        %v509 = vpack.c.b16 %v494, %v493
        %v510 = vpack.c.b16 %v496, %v495
        %v511 = vpack.c.b16 %v498, %v497
        %v512 = vpack.c.b16 %v500, %v499
        %v513 = vpack.c.b16 %v502, %v501
        %v514 = vpack.c.b16 %v504, %v503
        %v515 = vpack.c.b16 %v506, %v505
        %v516 = vpack.c.b16 %v508, %v507
        %v533 = vunpack.c.l.b16 %v461
        %v534 = vunpack.c.l.b16 %v462
        %v535 = vunpack.c.l.b16 %v463
        %v536 = vunpack.c.l.b16 %v464
        %v537 = vunpack.c.l.b16 %v465
        %v538 = vunpack.c.l.b16 %v466
        %v539 = vunpack.c.l.b16 %v467
        %v540 = vunpack.c.l.b16 %v468
        %v541 = vunpack.c.l.b16 %v469
        %v542 = vunpack.c.l.b16 %v470
        %v543 = vunpack.c.l.b16 %v471
        %v544 = vunpack.c.l.b16 %v472
        %v545 = vunpack.c.l.b16 %v473
        %v546 = vunpack.c.l.b16 %v474
        %v547 = vunpack.c.l.b16 %v475
        %v548 = vunpack.c.l.b16 %v476
        %v549 = vpack.c.b16 %v534, %v533
        %v550 = vpack.c.b16 %v536, %v535
        %v551 = vpack.c.b16 %v538, %v537
        %v552 = vpack.c.b16 %v540, %v539
        %v553 = vpack.c.b16 %v542, %v541
        %v554 = vpack.c.b16 %v544, %v543
        %v555 = vpack.c.b16 %v546, %v545
        %v556 = vpack.c.b16 %v548, %v547
        %vm557 = vcmask 31744
        %v559 = vsel %vm557, %v509, 0
        %v562 = vsel %vm557, %v510, 0
        %v565 = vsel %vm557, %v511, 0
        %v568 = vsel %vm557, %v512, 0
        %v571 = vsel %vm557, %v513, 0
        %v574 = vsel %vm557, %v514, 0
        %v577 = vsel %vm557, %v515, 0
        %v580 = vsel %vm557, %v516, 0
        %v583 = vsel %vm557, %v549, 0
        %v586 = vsel %vm557, %v550, 0
        %v589 = vsel %vm557, %v551, 0
        %v592 = vsel %vm557, %v552, 0
        %v595 = vsel %vm557, %v553, 0
        %v598 = vsel %vm557, %v554, 0
        %v601 = vsel %vm557, %v555, 0
        %v604 = vsel %vm557, %v556, 0
        %606 = vmatprep.subr.bf16.mxu0 0
        %607 = vmatpush1.bf16.xpose.msra.mxu0 %v583
        %608 = vmatprep.subr.bf16.mxu0 0
        %609 = vmatpush1.bf16.xpose.msra.mxu0 %v586
        %610 = vmatprep.subr.bf16.mxu0 0
        %611 = vmatpush1.bf16.xpose.msra.mxu0 %v589
        %612 = vmatprep.subr.bf16.mxu0 0
        %613 = vmatpush1.bf16.xpose.msra.mxu0 %v592
        %614 = vmatprep.subr.bf16.mxu0 0
        %615 = vmatpush1.bf16.xpose.msra.mxu0 %v595
        %616 = vmatprep.subr.bf16.mxu0 0
        %617 = vmatpush1.bf16.xpose.msra.mxu0 %v598
        %618 = vmatprep.subr.bf16.mxu0 0
        %619 = vmatpush1.bf16.xpose.msra.mxu0 %v601
        %620 = vmatprep.subr.bf16.mxu0 0
        %621 = vmatpush1.bf16.xpose.msra.mxu0 %v604
        %622 = vmatprep.subr.bf16.mxu0 0
        %623 = vmatpush1.bf16.xpose.msra.mxu0 0
        %624 = vmatprep.subr.bf16.mxu0 0
        %625 = vmatpush1.bf16.xpose.msra.mxu0 0
        %626 = vmatprep.subr.bf16.mxu0 0
        %627 = vmatpush1.bf16.xpose.msra.mxu0 0
        %628 = vmatprep.subr.bf16.mxu0 0
        %629 = vmatpush1.bf16.xpose.msra.mxu0 0
        %630 = vmatprep.subr.bf16.mxu0 0
        %631 = vmatpush1.bf16.xpose.msra.mxu0 0
        %632 = vmatprep.subr.bf16.mxu0 0
        %633 = vmatpush1.bf16.xpose.msra.mxu0 0
        %634 = vmatprep.subr.bf16.mxu0 0
        %635 = vmatpush1.bf16.xpose.msra.mxu0 0
        %636 = vmatprep.subr.bf16.mxu0 0
        %637 = vmatpush1.bf16.xpose.msra.mxu0 0
        %638 = vmatprep.mubr.bf16.mxu0 0
        %639 = vmatmul.mubr.bf16.gmra.mrb[0].mxu0 %v559
        %v640 = vpop.f32.mrb[0].mxu0
        %v641 = vadd.f32 0.0, %v640
        %v642 = vpop.f32.mrb[0].mxu0
        %v643 = vpop.f32.mrb[0].mxu0
        %v644 = vadd.f32 0.0, %v643
        %v645 = vpop.f32.mrb[0].mxu0
        %646 = vmatprep.mubr.bf16.mxu0 0
        %647 = vmatmul.mubr.bf16.gmra.mrb[0].mxu0 %v562
        %v648 = vpop.f32.mrb[0].mxu0
        %v649 = vadd.f32 0.0, %v648
        %v650 = vpop.f32.mrb[0].mxu0
        %v651 = vpop.f32.mrb[0].mxu0
        %v652 = vadd.f32 0.0, %v651
        %v653 = vpop.f32.mrb[0].mxu0
        %654 = vmatprep.mubr.bf16.mxu0 0
        %655 = vmatmul.mubr.bf16.gmra.mrb[0].mxu0 %v565
        %v656 = vpop.f32.mrb[0].mxu0
        %v657 = vadd.f32 0.0, %v656
        %v658 = vpop.f32.mrb[0].mxu0
        %v659 = vpop.f32.mrb[0].mxu0
        %v660 = vadd.f32 0.0, %v659
        %v661 = vpop.f32.mrb[0].mxu0
        %662 = vmatprep.mubr.bf16.mxu0 0
        %663 = vmatmul.mubr.bf16.gmra.mrb[0].mxu0 %v568
        %v664 = vpop.f32.mrb[0].mxu0
        %v665 = vadd.f32 0.0, %v664
        %v666 = vpop.f32.mrb[0].mxu0
        %v667 = vpop.f32.mrb[0].mxu0
        %v668 = vadd.f32 0.0, %v667
        %v669 = vpop.f32.mrb[0].mxu0
        %670 = vmatprep.mubr.bf16.mxu0 0
        %671 = vmatmul.mubr.bf16.gmra.mrb[0].mxu0 %v571
        %v672 = vpop.f32.mrb[0].mxu0
        %v673 = vadd.f32 0.0, %v672
        %v674 = vpop.f32.mrb[0].mxu0
        %v675 = vpop.f32.mrb[0].mxu0
        %v676 = vadd.f32 0.0, %v675
        %v677 = vpop.f32.mrb[0].mxu0
        %678 = vmatprep.mubr.bf16.mxu0 0
        %679 = vmatmul.mubr.bf16.gmra.mrb[0].mxu0 %v574
        %v680 = vpop.f32.mrb[0].mxu0
        %v681 = vadd.f32 0.0, %v680
        %v682 = vpop.f32.mrb[0].mxu0
        %v683 = vpop.f32.mrb[0].mxu0
        %v684 = vadd.f32 0.0, %v683
        %v685 = vpop.f32.mrb[0].mxu0
        %686 = vmatprep.mubr.bf16.mxu0 0
        %687 = vmatmul.mubr.bf16.gmra.mrb[0].mxu0 %v577
        %v688 = vpop.f32.mrb[0].mxu0
        %v689 = vadd.f32 0.0, %v688
        %v690 = vpop.f32.mrb[0].mxu0
        %v691 = vpop.f32.mrb[0].mxu0
        %v692 = vadd.f32 0.0, %v691
        %v693 = vpop.f32.mrb[0].mxu0
        %694 = vmatprep.mubr.bf16.mxu0 0
        %695 = vmatmul.mubr.bf16.gmra.mrb[0].mxu0 %v580
        %v696 = vpop.f32.mrb[0].mxu0
        %v697 = vadd.f32 0.0, %v696
        %v698 = vpop.f32.mrb[0].mxu0
        %v699 = vpop.f32.mrb[0].mxu0
        %v700 = vadd.f32 0.0, %v699
        %v701 = vpop.f32.mrb[0].mxu0
        %702 = vdwg.mxu0
        %v703 = vld [vmem:[#allocation2] sm:$0xff]
        %v704 = vld [vmem:[#allocation2 + $0x8] sm:$0xff]
        %v705 = vld [vmem:[#allocation2 + $0x10] sm:$0xff]
        %v706 = vld [vmem:[#allocation2 + $0x18] sm:$0xff]
        %v707 = vld [vmem:[#allocation2 + $0x20] sm:$0xff]
        %v708 = vld [vmem:[#allocation2 + $0x28] sm:$0xff]
        %v709 = vld [vmem:[#allocation2 + $0x30] sm:$0xff]
        %v710 = vld [vmem:[#allocation2 + $0x38] sm:$0xff]
        %v711 = vld [vmem:[#allocation2 + $0x40] sm:$0xff]
        %v712 = vld [vmem:[#allocation2 + $0x48] sm:$0xff]
        %v713 = vld [vmem:[#allocation2 + $0x50] sm:$0xff]
        %v714 = vld [vmem:[#allocation2 + $0x58] sm:$0xff]
        %v715 = vld [vmem:[#allocation2 + $0x60] sm:$0xff]
        %v716 = vld [vmem:[#allocation2 + $0x68] sm:$0xff]
        %v717 = vld [vmem:[#allocation2 + $0x70] sm:$0xff]
        %v718 = vld [vmem:[#allocation2 + $0x78] sm:$0xff]
        %719 = vmax.xlane.f32.xlu0 %v641
        %v720 = vpop.xlane.xlu0 %719
        %721 = vmax.xlane.f32.xlu0 %v644
        %v722 = vpop.xlane.xlu0 %721
        %723 = vmax.xlane.f32.xlu0 %v649
        %v724 = vpop.xlane.xlu0 %723
        %725 = vmax.xlane.f32.xlu0 %v652
        %v726 = vpop.xlane.xlu0 %725
        %727 = vmax.xlane.f32.xlu0 %v657
        %v728 = vpop.xlane.xlu0 %727
        %729 = vmax.xlane.f32.xlu0 %v660
        %v730 = vpop.xlane.xlu0 %729
        %731 = vmax.xlane.f32.xlu0 %v665
        %v732 = vpop.xlane.xlu0 %731
        %733 = vmax.xlane.f32.xlu0 %v668
        %v734 = vpop.xlane.xlu0 %733
        %735 = vmax.xlane.f32.xlu0 %v673
        %v736 = vpop.xlane.xlu0 %735
        %737 = vmax.xlane.f32.xlu0 %v676
        %v738 = vpop.xlane.xlu0 %737
        %739 = vmax.xlane.f32.xlu0 %v681
        %v740 = vpop.xlane.xlu0 %739
        %741 = vmax.xlane.f32.xlu0 %v684
        %v742 = vpop.xlane.xlu0 %741
        %743 = vmax.xlane.f32.xlu0 %v689
        %v744 = vpop.xlane.xlu0 %743
        %745 = vmax.xlane.f32.xlu0 %v692
        %v746 = vpop.xlane.xlu0 %745
        %747 = vmax.xlane.f32.xlu0 %v697
        %v748 = vpop.xlane.xlu0 %747
        %749 = vmax.xlane.f32.xlu0 %v700
        %v750 = vpop.xlane.xlu0 %749
        %v751 = vmax.f32 %v703, %v720
        %v752 = vmax.f32 %v704, %v722
        %v753 = vmax.f32 %v705, %v724
        %v754 = vmax.f32 %v706, %v726
        %v755 = vmax.f32 %v707, %v728
        %v756 = vmax.f32 %v708, %v730
        %v757 = vmax.f32 %v709, %v732
        %v758 = vmax.f32 %v710, %v734
        %v759 = vmax.f32 %v711, %v736
        %v760 = vmax.f32 %v712, %v738
        %v761 = vmax.f32 %v713, %v740
        %v762 = vmax.f32 %v714, %v742
        %v763 = vmax.f32 %v715, %v744
        %v764 = vmax.f32 %v716, %v746
        %v765 = vmax.f32 %v717, %v748
        %v766 = vmax.f32 %v718, %v750
        %v767 = vsub.f32 %v703, %v751
        %v768 = vsub.f32 %v704, %v752
        %v769 = vsub.f32 %v705, %v753
        %v770 = vsub.f32 %v706, %v754
        %v771 = vsub.f32 %v707, %v755
        %v772 = vsub.f32 %v708, %v756
        %v773 = vsub.f32 %v709, %v757
        %v774 = vsub.f32 %v710, %v758
        %v775 = vsub.f32 %v711, %v759
        %v776 = vsub.f32 %v712, %v760
        %v777 = vsub.f32 %v713, %v761
        %v778 = vsub.f32 %v714, %v762
        %v779 = vsub.f32 %v715, %v763
        %v780 = vsub.f32 %v716, %v764
        %v781 = vsub.f32 %v717, %v765
        %v782 = vsub.f32 %v718, %v766
        %v783 = vmul.f32 %v767, 1.442695
        %v784 = vpow.pop %v783
        %v785 = vmul.f32 %v768, 1.442695
        %v786 = vpow.pop %v785
        %v787 = vmul.f32 %v769, 1.442695
        %v788 = vpow.pop %v787
        %v789 = vmul.f32 %v770, 1.442695
        %v790 = vpow.pop %v789
        %v791 = vmul.f32 %v771, 1.442695
        %v792 = vpow.pop %v791
        %v793 = vmul.f32 %v772, 1.442695
        %v794 = vpow.pop %v793
        %v795 = vmul.f32 %v773, 1.442695
        %v796 = vpow.pop %v795
        %v797 = vmul.f32 %v774, 1.442695
        %v798 = vpow.pop %v797
        %v799 = vmul.f32 %v775, 1.442695
        %v800 = vpow.pop %v799
        %v801 = vmul.f32 %v776, 1.442695
        %v802 = vpow.pop %v801
        %v803 = vmul.f32 %v777, 1.442695
        %v804 = vpow.pop %v803
        %v805 = vmul.f32 %v778, 1.442695
        %v806 = vpow.pop %v805
        %v807 = vmul.f32 %v779, 1.442695
        %v808 = vpow.pop %v807
        %v809 = vmul.f32 %v780, 1.442695
        %v810 = vpow.pop %v809
        %v811 = vmul.f32 %v781, 1.442695
        %v812 = vpow.pop %v811
        %v813 = vmul.f32 %v782, 1.442695
        %v814 = vpow.pop %v813
        %816 = vset.pattern.permute.xlu0 0
        %817 = vperm.xlu0 %816, %v751
        %v818 = vpop.permute.xlu0 %817
        %821 = vset.pattern.permute.xlu0 0
        %822 = vperm.xlu0 %821, %v752
        %v823 = vpop.permute.xlu0 %822
        %826 = vset.pattern.permute.xlu0 0
        %827 = vperm.xlu0 %826, %v753
        %v828 = vpop.permute.xlu0 %827
        %831 = vset.pattern.permute.xlu0 0
        %832 = vperm.xlu0 %831, %v754
        %v833 = vpop.permute.xlu0 %832
        %836 = vset.pattern.permute.xlu0 0
        %837 = vperm.xlu0 %836, %v755
        %v838 = vpop.permute.xlu0 %837
        %841 = vset.pattern.permute.xlu0 0
        %842 = vperm.xlu0 %841, %v756
        %v843 = vpop.permute.xlu0 %842
        %846 = vset.pattern.permute.xlu0 0
        %847 = vperm.xlu0 %846, %v757
        %v848 = vpop.permute.xlu0 %847
        %851 = vset.pattern.permute.xlu0 0
        %852 = vperm.xlu0 %851, %v758
        %v853 = vpop.permute.xlu0 %852
        %856 = vset.pattern.permute.xlu0 0
        %857 = vperm.xlu0 %856, %v759
        %v858 = vpop.permute.xlu0 %857
        %861 = vset.pattern.permute.xlu0 0
        %862 = vperm.xlu0 %861, %v760
        %v863 = vpop.permute.xlu0 %862
        %866 = vset.pattern.permute.xlu0 0
        %867 = vperm.xlu0 %866, %v761
        %v868 = vpop.permute.xlu0 %867
        %871 = vset.pattern.permute.xlu0 0
        %872 = vperm.xlu0 %871, %v762
        %v873 = vpop.permute.xlu0 %872
        %876 = vset.pattern.permute.xlu0 0
        %877 = vperm.xlu0 %876, %v763
        %v878 = vpop.permute.xlu0 %877
        %881 = vset.pattern.permute.xlu0 0
        %882 = vperm.xlu0 %881, %v764
        %v883 = vpop.permute.xlu0 %882
        %886 = vset.pattern.permute.xlu0 0
        %887 = vperm.xlu0 %886, %v765
        %v888 = vpop.permute.xlu0 %887
        %891 = vset.pattern.permute.xlu0 0
        %892 = vperm.xlu0 %891, %v766
        %v893 = vpop.permute.xlu0 %892
        %v895 = vsub.f32 %v641, %v818
        %v896 = vsub.f32 %v644, %v823
        %v897 = vsub.f32 %v649, %v828
        %v898 = vsub.f32 %v652, %v833
        %v899 = vsub.f32 %v657, %v838
        %v900 = vsub.f32 %v660, %v843
        %v901 = vsub.f32 %v665, %v848
        %v902 = vsub.f32 %v668, %v853
        %v903 = vsub.f32 %v673, %v858
        %v904 = vsub.f32 %v676, %v863
        %v905 = vsub.f32 %v681, %v868
        %v906 = vsub.f32 %v684, %v873
        %v907 = vsub.f32 %v689, %v878
        %v908 = vsub.f32 %v692, %v883
        %v909 = vsub.f32 %v697, %v888
        %v910 = vsub.f32 %v700, %v893
        %v911 = vmul.f32 %v895, 1.442695
        %v912 = vpow.pop %v911
        %v913 = vmul.f32 %v896, 1.442695
        %v914 = vpow.pop %v913
        %v915 = vmul.f32 %v897, 1.442695
        %v916 = vpow.pop %v915
        %v917 = vmul.f32 %v898, 1.442695
        %v918 = vpow.pop %v917
        %v919 = vmul.f32 %v899, 1.442695
        %v920 = vpow.pop %v919
        %v921 = vmul.f32 %v900, 1.442695
        %v922 = vpow.pop %v921
        %v923 = vmul.f32 %v901, 1.442695
        %v924 = vpow.pop %v923
        %v925 = vmul.f32 %v902, 1.442695
        %v926 = vpow.pop %v925
        %v927 = vmul.f32 %v903, 1.442695
        %v928 = vpow.pop %v927
        %v929 = vmul.f32 %v904, 1.442695
        %v930 = vpow.pop %v929
        %v931 = vmul.f32 %v905, 1.442695
        %v932 = vpow.pop %v931
        %v933 = vmul.f32 %v906, 1.442695
        %v934 = vpow.pop %v933
        %v935 = vmul.f32 %v907, 1.442695
        %v936 = vpow.pop %v935
        %v937 = vmul.f32 %v908, 1.442695
        %v938 = vpow.pop %v937
        %v939 = vmul.f32 %v909, 1.442695
        %v940 = vpow.pop %v939
        %v941 = vmul.f32 %v910, 1.442695
        %v942 = vpow.pop %v941
        %v943 = vld [vmem:[#allocation3] sm:$0xff]
        %v944 = vld [vmem:[#allocation3 + $0x8] sm:$0xff]
        %v945 = vld [vmem:[#allocation3 + $0x10] sm:$0xff]
        %v946 = vld [vmem:[#allocation3 + $0x18] sm:$0xff]
        %v947 = vld [vmem:[#allocation3 + $0x20] sm:$0xff]
        %v948 = vld [vmem:[#allocation3 + $0x28] sm:$0xff]
        %v949 = vld [vmem:[#allocation3 + $0x30] sm:$0xff]
        %v950 = vld [vmem:[#allocation3 + $0x38] sm:$0xff]
        %v951 = vld [vmem:[#allocation3 + $0x40] sm:$0xff]
        %v952 = vld [vmem:[#allocation3 + $0x48] sm:$0xff]
        %v953 = vld [vmem:[#allocation3 + $0x50] sm:$0xff]
        %v954 = vld [vmem:[#allocation3 + $0x58] sm:$0xff]
        %v955 = vld [vmem:[#allocation3 + $0x60] sm:$0xff]
        %v956 = vld [vmem:[#allocation3 + $0x68] sm:$0xff]
        %v957 = vld [vmem:[#allocation3 + $0x70] sm:$0xff]
        %v958 = vld [vmem:[#allocation3 + $0x78] sm:$0xff]
        %v959 = vmul.f32 %v784, %v943
        %v960 = vmul.f32 %v786, %v944
        %v961 = vmul.f32 %v788, %v945
        %v962 = vmul.f32 %v790, %v946
        %v963 = vmul.f32 %v792, %v947
        %v964 = vmul.f32 %v794, %v948
        %v965 = vmul.f32 %v796, %v949
        %v966 = vmul.f32 %v798, %v950
        %v967 = vmul.f32 %v800, %v951
        %v968 = vmul.f32 %v802, %v952
        %v969 = vmul.f32 %v804, %v953
        %v970 = vmul.f32 %v806, %v954
        %v971 = vmul.f32 %v808, %v955
        %v972 = vmul.f32 %v810, %v956
        %v973 = vmul.f32 %v812, %v957
        %v974 = vmul.f32 %v814, %v958
        %975 = vadd.xlane.f32.xlu0 %v912
        %v976 = vpop.xlane.xlu0 %975
        %977 = vadd.xlane.f32.xlu0 %v914
        %v978 = vpop.xlane.xlu0 %977
        %979 = vadd.xlane.f32.xlu0 %v916
        %v980 = vpop.xlane.xlu0 %979
        %981 = vadd.xlane.f32.xlu0 %v918
        %v982 = vpop.xlane.xlu0 %981
        %983 = vadd.xlane.f32.xlu0 %v920
        %v984 = vpop.xlane.xlu0 %983
        %985 = vadd.xlane.f32.xlu0 %v922
        %v986 = vpop.xlane.xlu0 %985
        %987 = vadd.xlane.f32.xlu0 %v924
        %v988 = vpop.xlane.xlu0 %987
        %989 = vadd.xlane.f32.xlu0 %v926
        %v990 = vpop.xlane.xlu0 %989
        %991 = vadd.xlane.f32.xlu0 %v928
        %v992 = vpop.xlane.xlu0 %991
        %993 = vadd.xlane.f32.xlu0 %v930
        %v994 = vpop.xlane.xlu0 %993
        %995 = vadd.xlane.f32.xlu0 %v932
        %v996 = vpop.xlane.xlu0 %995
        %997 = vadd.xlane.f32.xlu0 %v934
        %v998 = vpop.xlane.xlu0 %997
        %999 = vadd.xlane.f32.xlu0 %v936
        %v1000 = vpop.xlane.xlu0 %999
        %1001 = vadd.xlane.f32.xlu0 %v938
        %v1002 = vpop.xlane.xlu0 %1001
        %1003 = vadd.xlane.f32.xlu0 %v940
        %v1004 = vpop.xlane.xlu0 %1003
        %1005 = vadd.xlane.f32.xlu0 %v942
        %v1006 = vpop.xlane.xlu0 %1005
        %v1007 = vadd.f32 %v959, %v976
        %v1008 = vadd.f32 %v960, %v978
        %v1009 = vadd.f32 %v961, %v980
        %v1010 = vadd.f32 %v962, %v982
        %v1011 = vadd.f32 %v963, %v984
        %v1012 = vadd.f32 %v964, %v986
        %v1013 = vadd.f32 %v965, %v988
        %v1014 = vadd.f32 %v966, %v990
        %v1015 = vadd.f32 %v967, %v992
        %v1016 = vadd.f32 %v968, %v994
        %v1017 = vadd.f32 %v969, %v996
        %v1018 = vadd.f32 %v970, %v998
        %v1019 = vadd.f32 %v971, %v1000
        %v1020 = vadd.f32 %v972, %v1002
        %v1021 = vadd.f32 %v973, %v1004
        %v1022 = vadd.f32 %v974, %v1006
        %vm1023 = vcmask 7168
        %1024 = vst.msk [vmem:[#allocation3] sm:$0xff] %vm1023, %v1007
        %1025 = vst.msk [vmem:[#allocation3 + $0x8] sm:$0xff] %vm1023, %v1008
        %1026 = vst.msk [vmem:[#allocation3 + $0x10] sm:$0xff] %vm1023, %v1009
        %1027 = vst.msk [vmem:[#allocation3 + $0x18] sm:$0xff] %vm1023, %v1010
        %1028 = vst.msk [vmem:[#allocation3 + $0x20] sm:$0xff] %vm1023, %v1011
        %1029 = vst.msk [vmem:[#allocation3 + $0x28] sm:$0xff] %vm1023, %v1012
        %1030 = vst.msk [vmem:[#allocation3 + $0x30] sm:$0xff] %vm1023, %v1013
        %1031 = vst.msk [vmem:[#allocation3 + $0x38] sm:$0xff] %vm1023, %v1014
        %1032 = vst.msk [vmem:[#allocation3 + $0x40] sm:$0xff] %vm1023, %v1015
        %1033 = vst.msk [vmem:[#allocation3 + $0x48] sm:$0xff] %vm1023, %v1016
        %1034 = vst.msk [vmem:[#allocation3 + $0x50] sm:$0xff] %vm1023, %v1017
        %1035 = vst.msk [vmem:[#allocation3 + $0x58] sm:$0xff] %vm1023, %v1018
        %1036 = vst.msk [vmem:[#allocation3 + $0x60] sm:$0xff] %vm1023, %v1019
        %1037 = vst.msk [vmem:[#allocation3 + $0x68] sm:$0xff] %vm1023, %v1020
        %1038 = vst.msk [vmem:[#allocation3 + $0x70] sm:$0xff] %vm1023, %v1021
        %1039 = vst.msk [vmem:[#allocation3 + $0x78] sm:$0xff] %vm1023, %v1022
        %v1040 = vld [vmem:[#allocation4] sm:$0xff]
        %v1041 = vld [vmem:[#allocation4 + $0x8] sm:$0xff]
        %v1042 = vld [vmem:[#allocation4 + $0x10] sm:$0xff]
        %v1043 = vld [vmem:[#allocation4 + $0x18] sm:$0xff]
        %v1044 = vld [vmem:[#allocation4 + $0x20] sm:$0xff]
        %v1045 = vld [vmem:[#allocation4 + $0x28] sm:$0xff]
        %v1046 = vld [vmem:[#allocation4 + $0x30] sm:$0xff]
        %v1047 = vld [vmem:[#allocation4 + $0x38] sm:$0xff]
        %v1048 = vld [vmem:[#allocation4 + $0x40] sm:$0xff]
        %v1049 = vld [vmem:[#allocation4 + $0x48] sm:$0xff]
        %v1050 = vld [vmem:[#allocation4 + $0x50] sm:$0xff]
        %v1051 = vld [vmem:[#allocation4 + $0x58] sm:$0xff]
        %v1052 = vld [vmem:[#allocation4 + $0x60] sm:$0xff]
        %v1053 = vld [vmem:[#allocation4 + $0x68] sm:$0xff]
        %v1054 = vld [vmem:[#allocation4 + $0x70] sm:$0xff]
        %v1055 = vld [vmem:[#allocation4 + $0x78] sm:$0xff]
        %1057 = vset.pattern.permute.xlu0 0
        %1058 = vperm.xlu0 %1057, %v784
        %v1059 = vpop.permute.xlu0 %1058
        %1062 = vset.pattern.permute.xlu0 0
        %1063 = vperm.xlu0 %1062, %v786
        %v1064 = vpop.permute.xlu0 %1063
        %1067 = vset.pattern.permute.xlu0 0
        %1068 = vperm.xlu0 %1067, %v788
        %v1069 = vpop.permute.xlu0 %1068
        %1072 = vset.pattern.permute.xlu0 0
        %1073 = vperm.xlu0 %1072, %v790
        %v1074 = vpop.permute.xlu0 %1073
        %1077 = vset.pattern.permute.xlu0 0
        %1078 = vperm.xlu0 %1077, %v792
        %v1079 = vpop.permute.xlu0 %1078
        %1082 = vset.pattern.permute.xlu0 0
        %1083 = vperm.xlu0 %1082, %v794
        %v1084 = vpop.permute.xlu0 %1083
        %1087 = vset.pattern.permute.xlu0 0
        %1088 = vperm.xlu0 %1087, %v796
        %v1089 = vpop.permute.xlu0 %1088
        %1092 = vset.pattern.permute.xlu0 0
        %1093 = vperm.xlu0 %1092, %v798
        %v1094 = vpop.permute.xlu0 %1093
        %1097 = vset.pattern.permute.xlu0 0
        %1098 = vperm.xlu0 %1097, %v800
        %v1099 = vpop.permute.xlu0 %1098
        %1102 = vset.pattern.permute.xlu0 0
        %1103 = vperm.xlu0 %1102, %v802
        %v1104 = vpop.permute.xlu0 %1103
        %1107 = vset.pattern.permute.xlu0 0
        %1108 = vperm.xlu0 %1107, %v804
        %v1109 = vpop.permute.xlu0 %1108
        %1112 = vset.pattern.permute.xlu0 0
        %1113 = vperm.xlu0 %1112, %v806
        %v1114 = vpop.permute.xlu0 %1113
        %1117 = vset.pattern.permute.xlu0 0
        %1118 = vperm.xlu0 %1117, %v808
        %v1119 = vpop.permute.xlu0 %1118
        %1122 = vset.pattern.permute.xlu0 0
        %1123 = vperm.xlu0 %1122, %v810
        %v1124 = vpop.permute.xlu0 %1123
        %1127 = vset.pattern.permute.xlu0 0
        %1128 = vperm.xlu0 %1127, %v812
        %v1129 = vpop.permute.xlu0 %1128
        %1132 = vset.pattern.permute.xlu0 0
        %1133 = vperm.xlu0 %1132, %v814
        %v1134 = vpop.permute.xlu0 %1133
        %v1136 = vmul.f32 %v1059, %v1040
        %v1137 = vmul.f32 %v1064, %v1041
        %v1138 = vmul.f32 %v1069, %v1042
        %v1139 = vmul.f32 %v1074, %v1043
        %v1140 = vmul.f32 %v1079, %v1044
        %v1141 = vmul.f32 %v1084, %v1045
        %v1142 = vmul.f32 %v1089, %v1046
        %v1143 = vmul.f32 %v1094, %v1047
        %v1144 = vmul.f32 %v1099, %v1048
        %v1145 = vmul.f32 %v1104, %v1049
        %v1146 = vmul.f32 %v1109, %v1050
        %v1147 = vmul.f32 %v1114, %v1051
        %v1148 = vmul.f32 %v1119, %v1052
        %v1149 = vmul.f32 %v1124, %v1053
        %v1150 = vmul.f32 %v1129, %v1054
        %v1151 = vmul.f32 %v1134, %v1055
        %v1152 = vpack.c.bf16 %v914, %v912
        %v1153 = vpack.c.bf16 %v918, %v916
        %v1154 = vpack.c.bf16 %v922, %v920
        %v1155 = vpack.c.bf16 %v926, %v924
        %v1156 = vpack.c.bf16 %v930, %v928
        %v1157 = vpack.c.bf16 %v934, %v932
        %v1158 = vpack.c.bf16 %v938, %v936
        %v1159 = vpack.c.bf16 %v942, %v940
        %v1160 = vld [vmem:[%s380] sm:$0xf]
        %v1161 = vld [vmem:[%s380 + $0x4] sm:$0xf]
        %v1162 = vld [vmem:[%s380 + $0x8] sm:$0xf]
        %v1163 = vld [vmem:[%s380 + $0xc] sm:$0xf]
        %v1164 = vld [vmem:[%s380 + $0x10] sm:$0xf]
        %v1165 = vld [vmem:[%s380 + $0x14] sm:$0xf]
        %v1166 = vld [vmem:[%s380 + $0x18] sm:$0xf]
        %v1167 = vld [vmem:[%s380 + $0x1c] sm:$0xf]
        %v1168 = vld [vmem:[%s380 + $0x20] sm:$0xf]
        %v1169 = vld [vmem:[%s380 + $0x24] sm:$0xf]
        %v1170 = vld [vmem:[%s380 + $0x28] sm:$0xf]
        %v1171 = vld [vmem:[%s380 + $0x2c] sm:$0xf]
        %v1172 = vld [vmem:[%s380 + $0x30] sm:$0xf]
        %v1173 = vld [vmem:[%s380 + $0x34] sm:$0xf]
        %v1174 = vld [vmem:[%s380 + $0x38] sm:$0xf]
        %v1175 = vld [vmem:[%s380 + $0x3c] sm:$0xf]
        %v1192 = vunpack.c.l.b16 %v1160
        %v1193 = vunpack.c.l.b16 %v1161
        %v1194 = vunpack.c.l.b16 %v1162
        %v1195 = vunpack.c.l.b16 %v1163
        %v1196 = vunpack.c.l.b16 %v1164
        %v1197 = vunpack.c.l.b16 %v1165
        %v1198 = vunpack.c.l.b16 %v1166
        %v1199 = vunpack.c.l.b16 %v1167
        %v1200 = vunpack.c.l.b16 %v1168
        %v1201 = vunpack.c.l.b16 %v1169
        %v1202 = vunpack.c.l.b16 %v1170
        %v1203 = vunpack.c.l.b16 %v1171
        %v1204 = vunpack.c.l.b16 %v1172
        %v1205 = vunpack.c.l.b16 %v1173
        %v1206 = vunpack.c.l.b16 %v1174
        %v1207 = vunpack.c.l.b16 %v1175
        %v1208 = vpack.c.b16 %v1193, %v1192
        %v1209 = vpack.c.b16 %v1195, %v1194
        %v1210 = vpack.c.b16 %v1197, %v1196
        %v1211 = vpack.c.b16 %v1199, %v1198
        %v1212 = vpack.c.b16 %v1201, %v1200
        %v1213 = vpack.c.b16 %v1203, %v1202
        %v1214 = vpack.c.b16 %v1205, %v1204
        %v1215 = vpack.c.b16 %v1207, %v1206
        %1224 = vmatprep.subr.bf16.mxu0 0
        %1225 = vmatpush1.bf16.msra.mxu0 %v1208
        %1226 = vmatprep.subr.bf16.mxu0 0
        %1227 = vmatpush1.bf16.msra.mxu0 %v1209
        %1228 = vmatprep.subr.bf16.mxu0 0
        %1229 = vmatpush1.bf16.msra.mxu0 %v1210
        %1230 = vmatprep.subr.bf16.mxu0 0
        %1231 = vmatpush1.bf16.msra.mxu0 %v1211
        %1232 = vmatprep.subr.bf16.mxu0 0
        %1233 = vmatpush1.bf16.msra.mxu0 %v1212
        %1234 = vmatprep.subr.bf16.mxu0 0
        %1235 = vmatpush1.bf16.msra.mxu0 %v1213
        %1236 = vmatprep.subr.bf16.mxu0 0
        %1237 = vmatpush1.bf16.msra.mxu0 %v1214
        %1238 = vmatprep.subr.bf16.mxu0 0
        %1239 = vmatpush1.bf16.msra.mxu0 %v1215
        %1240 = vmatprep.subr.bf16.mxu0 0
        %1241 = vmatpush1.bf16.msra.mxu0 0
        %1242 = vmatprep.subr.bf16.mxu0 0
        %1243 = vmatpush1.bf16.msra.mxu0 0
        %1244 = vmatprep.subr.bf16.mxu0 0
        %1245 = vmatpush1.bf16.msra.mxu0 0
        %1246 = vmatprep.subr.bf16.mxu0 0
        %1247 = vmatpush1.bf16.msra.mxu0 0
        %1248 = vmatprep.subr.bf16.mxu0 0
        %1249 = vmatpush1.bf16.msra.mxu0 0
        %1250 = vmatprep.subr.bf16.mxu0 0
        %1251 = vmatpush1.bf16.msra.mxu0 0
        %1252 = vmatprep.subr.bf16.mxu0 0
        %1253 = vmatpush1.bf16.msra.mxu0 0
        %1254 = vmatprep.subr.bf16.mxu0 0
        %1255 = vmatpush1.bf16.msra.mxu0 0
        %1256 = vmatprep.mubr.bf16.mxu0 0
        %1257 = vmatmul.mubr.bf16.gmra.mrb[0].mxu0 %v1152
        %v1258 = vpop.f32.mrb[0].mxu0
        %v1259 = vadd.f32 0.0, %v1258
        %v1260 = vpop.f32.mrb[0].mxu0
        %v1261 = vpop.f32.mrb[0].mxu0
        %v1262 = vadd.f32 0.0, %v1261
        %v1263 = vpop.f32.mrb[0].mxu0
        %1264 = vmatprep.mubr.bf16.mxu0 0
        %1265 = vmatmul.mubr.bf16.gmra.mrb[0].mxu0 %v1153
        %v1266 = vpop.f32.mrb[0].mxu0
        %v1267 = vadd.f32 0.0, %v1266
        %v1268 = vpop.f32.mrb[0].mxu0
        %v1269 = vpop.f32.mrb[0].mxu0
        %v1270 = vadd.f32 0.0, %v1269
        %v1271 = vpop.f32.mrb[0].mxu0
        %1272 = vmatprep.mubr.bf16.mxu0 0
        %1273 = vmatmul.mubr.bf16.gmra.mrb[0].mxu0 %v1154
        %v1274 = vpop.f32.mrb[0].mxu0
        %v1275 = vadd.f32 0.0, %v1274
        %v1276 = vpop.f32.mrb[0].mxu0
        %v1277 = vpop.f32.mrb[0].mxu0
        %v1278 = vadd.f32 0.0, %v1277
        %v1279 = vpop.f32.mrb[0].mxu0
        %1280 = vmatprep.mubr.bf16.mxu0 0
        %1281 = vmatmul.mubr.bf16.gmra.mrb[0].mxu0 %v1155
        %v1282 = vpop.f32.mrb[0].mxu0
        %v1283 = vadd.f32 0.0, %v1282
        %v1284 = vpop.f32.mrb[0].mxu0
        %v1285 = vpop.f32.mrb[0].mxu0
        %v1286 = vadd.f32 0.0, %v1285
        %v1287 = vpop.f32.mrb[0].mxu0
        %1288 = vmatprep.mubr.bf16.mxu0 0
        %1289 = vmatmul.mubr.bf16.gmra.mrb[0].mxu0 %v1156
        %v1290 = vpop.f32.mrb[0].mxu0
        %v1291 = vadd.f32 0.0, %v1290
        %v1292 = vpop.f32.mrb[0].mxu0
        %v1293 = vpop.f32.mrb[0].mxu0
        %v1294 = vadd.f32 0.0, %v1293
        %v1295 = vpop.f32.mrb[0].mxu0
        %1296 = vmatprep.mubr.bf16.mxu0 0
        %1297 = vmatmul.mubr.bf16.gmra.mrb[0].mxu0 %v1157
        %v1298 = vpop.f32.mrb[0].mxu0
        %v1299 = vadd.f32 0.0, %v1298
        %v1300 = vpop.f32.mrb[0].mxu0
        %v1301 = vpop.f32.mrb[0].mxu0
        %v1302 = vadd.f32 0.0, %v1301
        %v1303 = vpop.f32.mrb[0].mxu0
        %1304 = vmatprep.mubr.bf16.mxu0 0
        %1305 = vmatmul.mubr.bf16.gmra.mrb[0].mxu0 %v1158
        %v1306 = vpop.f32.mrb[0].mxu0
        %v1307 = vadd.f32 0.0, %v1306
        %v1308 = vpop.f32.mrb[0].mxu0
        %v1309 = vpop.f32.mrb[0].mxu0
        %v1310 = vadd.f32 0.0, %v1309
        %v1311 = vpop.f32.mrb[0].mxu0
        %1312 = vmatprep.mubr.bf16.mxu0 0
        %1313 = vmatmul.mubr.bf16.gmra.mrb[0].mxu0 %v1159
        %v1314 = vpop.f32.mrb[0].mxu0
        %v1315 = vadd.f32 0.0, %v1314
        %v1316 = vpop.f32.mrb[0].mxu0
        %v1317 = vpop.f32.mrb[0].mxu0
        %v1318 = vadd.f32 0.0, %v1317
        %v1319 = vpop.f32.mrb[0].mxu0
        %1320 = vdwg.mxu0
        %v1321 = vadd.f32 %v1136, %v1259
        %v1322 = vadd.f32 %v1137, %v1262
        %v1323 = vadd.f32 %v1138, %v1267
        %v1324 = vadd.f32 %v1139, %v1270
        %v1325 = vadd.f32 %v1140, %v1275
        %v1326 = vadd.f32 %v1141, %v1278
        %v1327 = vadd.f32 %v1142, %v1283
        %v1328 = vadd.f32 %v1143, %v1286
        %v1329 = vadd.f32 %v1144, %v1291
        %v1330 = vadd.f32 %v1145, %v1294
        %v1331 = vadd.f32 %v1146, %v1299
        %v1332 = vadd.f32 %v1147, %v1302
        %v1333 = vadd.f32 %v1148, %v1307
        %v1334 = vadd.f32 %v1149, %v1310
        %v1335 = vadd.f32 %v1150, %v1315
        %v1336 = vadd.f32 %v1151, %v1318
        %1337 = vst.msk [vmem:[#allocation4] sm:$0xff] %vm557, %v1321
        %1338 = vst.msk [vmem:[#allocation4 + $0x8] sm:$0xff] %vm557, %v1322
        %1339 = vst.msk [vmem:[#allocation4 + $0x10] sm:$0xff] %vm557, %v1323
        %1340 = vst.msk [vmem:[#allocation4 + $0x18] sm:$0xff] %vm557, %v1324
        %1341 = vst.msk [vmem:[#allocation4 + $0x20] sm:$0xff] %vm557, %v1325
        %1342 = vst.msk [vmem:[#allocation4 + $0x28] sm:$0xff] %vm557, %v1326
        %1343 = vst.msk [vmem:[#allocation4 + $0x30] sm:$0xff] %vm557, %v1327
        %1344 = vst.msk [vmem:[#allocation4 + $0x38] sm:$0xff] %vm557, %v1328
        %1345 = vst.msk [vmem:[#allocation4 + $0x40] sm:$0xff] %vm557, %v1329
        %1346 = vst.msk [vmem:[#allocation4 + $0x48] sm:$0xff] %vm557, %v1330
        %1347 = vst.msk [vmem:[#allocation4 + $0x50] sm:$0xff] %vm557, %v1331
        %1348 = vst.msk [vmem:[#allocation4 + $0x58] sm:$0xff] %vm557, %v1332
        %1349 = vst.msk [vmem:[#allocation4 + $0x60] sm:$0xff] %vm557, %v1333
        %1350 = vst.msk [vmem:[#allocation4 + $0x68] sm:$0xff] %vm557, %v1334
        %1351 = vst.msk [vmem:[#allocation4 + $0x70] sm:$0xff] %vm557, %v1335
        %1352 = vst.msk [vmem:[#allocation4 + $0x78] sm:$0xff] %vm557, %v1336
        %1353 = vst.msk [vmem:[#allocation2] sm:$0xff] %vm1023, %v751
        %1354 = vst.msk [vmem:[#allocation2 + $0x8] sm:$0xff] %vm1023, %v752
        %1355 = vst.msk [vmem:[#allocation2 + $0x10] sm:$0xff] %vm1023, %v753
        %1356 = vst.msk [vmem:[#allocation2 + $0x18] sm:$0xff] %vm1023, %v754
        %1357 = vst.msk [vmem:[#allocation2 + $0x20] sm:$0xff] %vm1023, %v755
        %1358 = vst.msk [vmem:[#allocation2 + $0x28] sm:$0xff] %vm1023, %v756
        %1359 = vst.msk [vmem:[#allocation2 + $0x30] sm:$0xff] %vm1023, %v757
        %1360 = vst.msk [vmem:[#allocation2 + $0x38] sm:$0xff] %vm1023, %v758
        %1361 = vst.msk [vmem:[#allocation2 + $0x40] sm:$0xff] %vm1023, %v759
        %1362 = vst.msk [vmem:[#allocation2 + $0x48] sm:$0xff] %vm1023, %v760
        %1363 = vst.msk [vmem:[#allocation2 + $0x50] sm:$0xff] %vm1023, %v761
        %1364 = vst.msk [vmem:[#allocation2 + $0x58] sm:$0xff] %vm1023, %v762
        %1365 = vst.msk [vmem:[#allocation2 + $0x60] sm:$0xff] %vm1023, %v763
        %1366 = vst.msk [vmem:[#allocation2 + $0x68] sm:$0xff] %vm1023, %v764
        %1367 = vst.msk [vmem:[#allocation2 + $0x70] sm:$0xff] %vm1023, %v765
        %1368 = vst.msk [vmem:[#allocation2 + $0x78] sm:$0xff] %vm1023, %v766
        %p1369 = scmp.eq.s32.totalorder %s27, 1
        // Predicated region
        $region49: #{tpu_custom_call.1} parent=43 // pred_check
          %p1370 = pneg %p1369
        $region50: #{tpu_custom_call.1} parent=43 // pred_check_branch
          %1372 = sbr.rel (%p1370) target = $region52
        $region51: #{tpu_custom_call.1} parent=43 // pred_region
          %v1373 = vld [vmem:[#allocation4] sm:$0xff]
          %v1374 = vld [vmem:[#allocation4 + $0x8] sm:$0xff]
          %v1375 = vld [vmem:[#allocation4 + $0x10] sm:$0xff]
          %v1376 = vld [vmem:[#allocation4 + $0x18] sm:$0xff]
          %v1377 = vld [vmem:[#allocation4 + $0x20] sm:$0xff]
          %v1378 = vld [vmem:[#allocation4 + $0x28] sm:$0xff]
          %v1379 = vld [vmem:[#allocation4 + $0x30] sm:$0xff]
          %v1380 = vld [vmem:[#allocation4 + $0x38] sm:$0xff]
          %v1381 = vld [vmem:[#allocation4 + $0x40] sm:$0xff]
          %v1382 = vld [vmem:[#allocation4 + $0x48] sm:$0xff]
          %v1383 = vld [vmem:[#allocation4 + $0x50] sm:$0xff]
          %v1384 = vld [vmem:[#allocation4 + $0x58] sm:$0xff]
          %v1385 = vld [vmem:[#allocation4 + $0x60] sm:$0xff]
          %v1386 = vld [vmem:[#allocation4 + $0x68] sm:$0xff]
          %v1387 = vld [vmem:[#allocation4 + $0x70] sm:$0xff]
          %v1388 = vld [vmem:[#allocation4 + $0x78] sm:$0xff]
          %v1389 = vld [vmem:[#allocation3] sm:$0xff]
          %v1390 = vld [vmem:[#allocation3 + $0x8] sm:$0xff]
          %v1391 = vld [vmem:[#allocation3 + $0x10] sm:$0xff]
          %v1392 = vld [vmem:[#allocation3 + $0x18] sm:$0xff]
          %v1393 = vld [vmem:[#allocation3 + $0x20] sm:$0xff]
          %v1394 = vld [vmem:[#allocation3 + $0x28] sm:$0xff]
          %v1395 = vld [vmem:[#allocation3 + $0x30] sm:$0xff]
          %v1396 = vld [vmem:[#allocation3 + $0x38] sm:$0xff]
          %v1397 = vld [vmem:[#allocation3 + $0x40] sm:$0xff]
          %v1398 = vld [vmem:[#allocation3 + $0x48] sm:$0xff]
          %v1399 = vld [vmem:[#allocation3 + $0x50] sm:$0xff]
          %v1400 = vld [vmem:[#allocation3 + $0x58] sm:$0xff]
          %v1401 = vld [vmem:[#allocation3 + $0x60] sm:$0xff]
          %v1402 = vld [vmem:[#allocation3 + $0x68] sm:$0xff]
          %v1403 = vld [vmem:[#allocation3 + $0x70] sm:$0xff]
          %v1404 = vld [vmem:[#allocation3 + $0x78] sm:$0xff]
          %v1405 = vrcp.pop %v1389
          %v1406 = vrcp.pop %v1390
          %v1407 = vrcp.pop %v1391
          %v1408 = vrcp.pop %v1392
          %v1409 = vrcp.pop %v1393
          %v1410 = vrcp.pop %v1394
          %v1411 = vrcp.pop %v1395
          %v1412 = vrcp.pop %v1396
          %v1413 = vrcp.pop %v1397
          %v1414 = vrcp.pop %v1398
          %v1415 = vrcp.pop %v1399
          %v1416 = vrcp.pop %v1400
          %v1417 = vrcp.pop %v1401
          %v1418 = vrcp.pop %v1402
          %v1419 = vrcp.pop %v1403
          %v1420 = vrcp.pop %v1404
          %1422 = vset.pattern.permute.xlu0 0
          %1423 = vperm.xlu0 %1422, %v1405
          %v1424 = vpop.permute.xlu0 %1423
          %1427 = vset.pattern.permute.xlu0 0
          %1428 = vperm.xlu0 %1427, %v1406
          %v1429 = vpop.permute.xlu0 %1428
          %1432 = vset.pattern.permute.xlu0 0
          %1433 = vperm.xlu0 %1432, %v1407
          %v1434 = vpop.permute.xlu0 %1433
          %1437 = vset.pattern.permute.xlu0 0
          %1438 = vperm.xlu0 %1437, %v1408
          %v1439 = vpop.permute.xlu0 %1438
          %1442 = vset.pattern.permute.xlu0 0
          %1443 = vperm.xlu0 %1442, %v1409
          %v1444 = vpop.permute.xlu0 %1443
          %1447 = vset.pattern.permute.xlu0 0
          %1448 = vperm.xlu0 %1447, %v1410
          %v1449 = vpop.permute.xlu0 %1448
          %1452 = vset.pattern.permute.xlu0 0
          %1453 = vperm.xlu0 %1452, %v1411
          %v1454 = vpop.permute.xlu0 %1453
          %1457 = vset.pattern.permute.xlu0 0
          %1458 = vperm.xlu0 %1457, %v1412
          %v1459 = vpop.permute.xlu0 %1458
          %1462 = vset.pattern.permute.xlu0 0
          %1463 = vperm.xlu0 %1462, %v1413
          %v1464 = vpop.permute.xlu0 %1463
          %1467 = vset.pattern.permute.xlu0 0
          %1468 = vperm.xlu0 %1467, %v1414
          %v1469 = vpop.permute.xlu0 %1468
          %1472 = vset.pattern.permute.xlu0 0
          %1473 = vperm.xlu0 %1472, %v1415
          %v1474 = vpop.permute.xlu0 %1473
          %1477 = vset.pattern.permute.xlu0 0
          %1478 = vperm.xlu0 %1477, %v1416
          %v1479 = vpop.permute.xlu0 %1478
          %1482 = vset.pattern.permute.xlu0 0
          %1483 = vperm.xlu0 %1482, %v1417
          %v1484 = vpop.permute.xlu0 %1483
          %1487 = vset.pattern.permute.xlu0 0
          %1488 = vperm.xlu0 %1487, %v1418
          %v1489 = vpop.permute.xlu0 %1488
          %1492 = vset.pattern.permute.xlu0 0
          %1493 = vperm.xlu0 %1492, %v1419
          %v1494 = vpop.permute.xlu0 %1493
          %1497 = vset.pattern.permute.xlu0 0
          %1498 = vperm.xlu0 %1497, %v1420
          %v1499 = vpop.permute.xlu0 %1498
          %v1501 = vmul.f32 %v1373, %v1424
          %v1502 = vmul.f32 %v1374, %v1429
          %v1503 = vmul.f32 %v1375, %v1434
          %v1504 = vmul.f32 %v1376, %v1439
          %v1505 = vmul.f32 %v1377, %v1444
          %v1506 = vmul.f32 %v1378, %v1449
          %v1507 = vmul.f32 %v1379, %v1454
          %v1508 = vmul.f32 %v1380, %v1459
          %v1509 = vmul.f32 %v1381, %v1464
          %v1510 = vmul.f32 %v1382, %v1469
          %v1511 = vmul.f32 %v1383, %v1474
          %v1512 = vmul.f32 %v1384, %v1479
          %v1513 = vmul.f32 %v1385, %v1484
          %v1514 = vmul.f32 %v1386, %v1489
          %v1515 = vmul.f32 %v1387, %v1494
          %v1516 = vmul.f32 %v1388, %v1499
          %v1517 = vpack.c.bf16 %v1502, %v1501
          %v1518 = vpack.c.bf16 %v1504, %v1503
          %v1519 = vpack.c.bf16 %v1506, %v1505
          %v1520 = vpack.c.bf16 %v1508, %v1507
          %v1521 = vpack.c.bf16 %v1510, %v1509
          %v1522 = vpack.c.bf16 %v1512, %v1511
          %v1523 = vpack.c.bf16 %v1514, %v1513
          %v1524 = vpack.c.bf16 %v1516, %v1515
          %v1525 = vld [vmem:[%s4] sm:$0x3]
          %v1526 = vld [vmem:[%s5] sm:$0xf]
          %1528 = vset.pattern.permute.xlu0 0
          %1529 = vperm.xlu0 %1528, %v1526
          %v1530 = vpop.permute.xlu0 %1529
          %v1533 = vsel %vm557, %v1525, 0
          %v1536 = vsel %vm557, %v1517, 0
          %v1539 = vsel %vm557, %v1518, 0
          %v1542 = vsel %vm557, %v1519, 0
          %v1545 = vsel %vm557, %v1520, 0
          %v1548 = vsel %vm557, %v1521, 0
          %v1551 = vsel %vm557, %v1522, 0
          %v1554 = vsel %vm557, %v1523, 0
          %v1557 = vsel %vm557, %v1524, 0
          %1559 = vmatprep.subr.bf16.mxu0 0
          %1560 = vmatpush1.bf16.xpose.msra.mxu0 %v1536
          %1561 = vmatprep.subr.bf16.mxu0 0
          %1562 = vmatpush1.bf16.xpose.msra.mxu0 %v1539
          %1563 = vmatprep.subr.bf16.mxu0 0
          %1564 = vmatpush1.bf16.xpose.msra.mxu0 %v1542
          %1565 = vmatprep.subr.bf16.mxu0 0
          %1566 = vmatpush1.bf16.xpose.msra.mxu0 %v1545
          %1567 = vmatprep.subr.bf16.mxu0 0
          %1568 = vmatpush1.bf16.xpose.msra.mxu0 %v1548
          %1569 = vmatprep.subr.bf16.mxu0 0
          %1570 = vmatpush1.bf16.xpose.msra.mxu0 %v1551
          %1571 = vmatprep.subr.bf16.mxu0 0
          %1572 = vmatpush1.bf16.xpose.msra.mxu0 %v1554
          %1573 = vmatprep.subr.bf16.mxu0 0
          %1574 = vmatpush1.bf16.xpose.msra.mxu0 %v1557
          %1575 = vmatprep.subr.bf16.mxu0 0
          %1576 = vmatpush1.bf16.xpose.msra.mxu0 0
          %1577 = vmatprep.subr.bf16.mxu0 0
          %1578 = vmatpush1.bf16.xpose.msra.mxu0 0
          %1579 = vmatprep.subr.bf16.mxu0 0
          %1580 = vmatpush1.bf16.xpose.msra.mxu0 0
          %1581 = vmatprep.subr.bf16.mxu0 0
          %1582 = vmatpush1.bf16.xpose.msra.mxu0 0
          %1583 = vmatprep.subr.bf16.mxu0 0
          %1584 = vmatpush1.bf16.xpose.msra.mxu0 0
          %1585 = vmatprep.subr.bf16.mxu0 0
          %1586 = vmatpush1.bf16.xpose.msra.mxu0 0
          %1587 = vmatprep.subr.bf16.mxu0 0
          %1588 = vmatpush1.bf16.xpose.msra.mxu0 0
          %1589 = vmatprep.subr.bf16.mxu0 0
          %1590 = vmatpush1.bf16.xpose.msra.mxu0 0
          %1591 = vmatprep.mubr.bf16.mxu0 0
          %1592 = vmatmul.mubr.bf16.gmra.mrb[0].mxu0 %v1533
          %v1593 = vpop.f32.mrb[0].mxu0
          %v1594 = vadd.f32 %v1530, %v1593
          %v1595 = vpop.f32.mrb[0].mxu0
          %v1596 = vpop.f32.mrb[0].mxu0
          %v1597 = vpop.f32.mrb[0].mxu0
          %1598 = vdwg.mxu0
          %v1599 = vld [vmem:[%s389] sm:$0xf]
          %v1600 = vadd.f32 %v1594, %v1599
          %1601 = vst [vmem:[%s351] sm:$0xf] %v1600
        $region52: #{tpu_custom_call.1} parent=43 // pred_fallthru
          _
        %s1602 = sand.u32 %s203, 1
        %s1603 = scalar_lea.sflag [#allocation6], %s1602
        %s1604 = sand.u32 %s203, 1
        %s1605 = smul.addr %s1604, 4
        %s1606 = scalar_lea.vmem [#allocation5], %s1605
        // Predicated region
        $region53: #{tpu_custom_call.1} parent=43 // pred_check
          %p1607 = pneg %p213
        $region54: #{tpu_custom_call.1} parent=43 // pred_check_branch
          %1609 = sbr.rel (%p1607) target = $region56
        $region55: #{tpu_custom_call.1} parent=43 // pred_region
          %s1611 = ssub.s32 64, 64
          %1612 = vsyncadd %s1603, %s1611
          %s1613 = smul.addr %s25, 2
          %s1614 = sadd.s32 %s26, %s1613
          %s1615 = smul.addr %s1614, 64
          %s1616 = scalar_lea.hbm %s6, %s1615
          %s1618 = sshll.u32 %s1606, 4
          %s1619 = int_to_ptr.vmem [resolvable:$true] %s1618
          %1621 = dma.vmem_to_hbm [thread:$0]  %s1619, 64, %s1616, %s1603
        $region56: #{tpu_custom_call.1} parent=43 // pred_fallthru
          _
      $region44: #{tpu_custom_call.1} parent=5 // pred_fallthru
        _
      %p1622 = scmp.le.s32.totalorder 2, %s15
      // Predicated region
      $region57: #{tpu_custom_call.1} parent=5 // pred_check
        %p1623 = pneg %p1622
      $region58: #{tpu_custom_call.1} parent=5 // pred_check_branch
        %1625 = sbr.rel (%p1623) target = $region60
      $region59: #{tpu_custom_call.1} parent=5 // pred_region
        %s1626 = ssub.s32 %s15, 2
        // Predicated region
        $region61: #{tpu_custom_call.1} parent=59 // pred_check
          %p1627 = pneg %p219
        $region62: #{tpu_custom_call.1} parent=59 // pred_check_branch
          %1629 = sbr.rel (%p1627) target = $region64
        $region63: #{tpu_custom_call.1} parent=59 // pred_region
          %s1630 = sand.u32 %s204, 1
          %s1631 = scalar_lea.sflag [#allocation6], %s1630
          %s1632 = sand.u32 %s204, 1
          %s1633 = smul.addr %s1632, 4
          %s1634 = scalar_lea.vmem [#allocation5], %s1633
          %1635 = dma.done %s1631, 64
        $region64: #{tpu_custom_call.1} parent=59 // pred_fallthru
          _
      $region60: #{tpu_custom_call.1} parent=5 // pred_fallthru
        _
    $region6: #{tpu_custom_call.1} parent=1 // loop_footer
      %s19 = sadd.s32 1, %s15
    $region7: #{tpu_custom_call.1} parent=1 // loop_footer_branch
      %14 = sbr.rel target = $region3
    $region8: #{tpu_custom_call.1} parent=1 // loop_exit
      _
    %1636 = vsyncpa [#allocation6], 1
    %s1637 = scalar_lea.sflag [#allocation6], 1
    %1638 = vsyncpa %s1637, 1

</llo_original>
